<compile_context>
chip_gen: v5e
topology: v5e:2x2
jax: 0.10.0
libtpu: 0.0.40
codegen_flags: <defaults>
</compile_context>

<pallas_src>
import math

import jax
import jax.numpy as jnp
from jax import lax
from jax.experimental import pallas as pl
from jax.experimental.pallas import tpu as pltpu

# ---- small, forward-consistent model hyperparameters ----
VOCAB = 64
D_MODEL = 32
NUM_HEADS = 4
D_K = D_MODEL // NUM_HEADS
D_FF = 64
NUM_LAYERS = 2
LN_EPS = 1e-5            # PyTorch nn.LayerNorm default eps
NEG_BIG = -1e30          # finite "-inf" for the causal/block mask
VPAD = 128               # lane-dense padded vocab width for the logits store


def _layernorm(x, g, b):
    """PyTorch-style LayerNorm over the last axis (biased variance)."""
    mu = jnp.mean(x, axis=-1, keepdims=True)
    var = jnp.mean(jnp.square(x - mu), axis=-1, keepdims=True)
    return (x - mu) * lax.rsqrt(var + LN_EPS) * g + b


def _gelu_exact(x):
    """Exact (erf-based) GELU, matching torch.nn.functional.gelu default."""
    return 0.5 * x * (1.0 + lax.erf(x * (1.0 / math.sqrt(2.0))))


# --------------------------------------------------------------------------
# Single fused kernel: whole GPT-2 forward for all B*S token rows at once.
# --------------------------------------------------------------------------
def gpt2_fused_kernel(ids_ref, pe_ref, bias_ref, emb_ref, embt_ref,
                      wqkv_ref, wo_ref, w1_ref, w2_ref, vec_ref, fln_ref,
                      out_ref):
    total = pe_ref.shape[0]                              # B*S rows

    # ---- token embedding as one-hot matmul; ids come from SMEM scalars ----
    row_iota = lax.broadcasted_iota(jnp.int32, (total, VOCAB), 0)
    col_iota = lax.broadcasted_iota(jnp.int32, (total, VOCAB), 1)
    tok = jnp.zeros((total, VOCAB), jnp.int32)
    for i in range(total):                               # tiny static loop
        tok = jnp.where(row_iota == i, ids_ref[i], tok)
    onehot = (tok == col_iota).astype(jnp.float32)

    x = jnp.dot(onehot, emb_ref[...], preferred_element_type=jnp.float32)
    x = x * math.sqrt(D_MODEL) + pe_ref[...]             # (total, D)

    bias = bias_ref[...]                                 # (total, total) additive mask

    for l in range(NUM_LAYERS):                          # static; weights resident
        # ---- fused QKV: ONE matmul; Q columns pre-scaled by 1/sqrt(d_k) ----
        qkv = jnp.dot(x, wqkv_ref[l], preferred_element_type=jnp.float32)  # (total, 3D)
        q = qkv[:, :D_MODEL]
        k = qkv[:, D_MODEL:2 * D_MODEL]
        v = qkv[:, 2 * D_MODEL:]

        # head-major views (H, total, D_K) via lane slices + stack
        qh = jnp.stack([q[:, h * D_K:(h + 1) * D_K] for h in range(NUM_HEADS)], axis=0)
        kh = jnp.stack([k[:, h * D_K:(h + 1) * D_K] for h in range(NUM_HEADS)], axis=0)
        vh = jnp.stack([v[:, h * D_K:(h + 1) * D_K] for h in range(NUM_HEADS)], axis=0)

        # ---- batched-head attention with block-diagonal causal bias ----
        scores = jnp.einsum('hqd,hkd->hqk', qh, kh,
                            preferred_element_type=jnp.float32)            # (H, total, total)
        scores = scores + bias[None, :, :]
        scores = scores - jnp.max(scores, axis=-1, keepdims=True)
        p = jnp.exp(scores)
        p = p * pl.reciprocal(jnp.sum(p, axis=-1, keepdims=True), approx=True)
        ctx = jnp.einsum('hqk,hkd->hqd', p, vh,
                         preferred_element_type=jnp.float32)               # (H, total, D_K)

        # ---- fused output projection: heads back onto lanes, ONE matmul ----
        ctx2 = jnp.concatenate([ctx[h] for h in range(NUM_HEADS)], axis=1)  # (total, D)
        attn = jnp.dot(ctx2, wo_ref[l], preferred_element_type=jnp.float32)

        # ---- packed per-layer vectors ----
        vec = vec_ref[l]                                  # (8, D_FF)
        b1 = vec[0:1, :]                                  # (1, D_FF)
        b2 = vec[1:2, :D_MODEL]
        g1 = vec[2:3, :D_MODEL]
        be1 = vec[3:4, :D_MODEL]
        g2 = vec[4:5, :D_MODEL]
        be2 = vec[5:6, :D_MODEL]

        # residual + norm1   (dropout identity at inference)
        x1 = _layernorm(x + attn, g1, be1)

        # ---- position-wise feed-forward ----
        h1 = jnp.dot(x1, w1_ref[l], preferred_element_type=jnp.float32) + b1
        h1 = _gelu_exact(h1)
        ff = jnp.dot(h1, w2_ref[l], preferred_element_type=jnp.float32) + b2

        # residual + norm2
        x = _layernorm(x1 + ff, g2, be2)

    # ---- final LayerNorm + tied output projection (lane-dense 128 store) ----
    fln = fln_ref[...]                                    # (2, D)
    xf = _layernorm(x, fln[0:1, :], fln[1:2, :])
    out_ref[...] = jnp.dot(xf, embt_ref[...],
                           preferred_element_type=jnp.float32)  # (total, 128)


# --------------------------------------------------------------------------
# Wrapper: parameter packing, positional encoding, pallas_call.
# --------------------------------------------------------------------------
def positional_encoding(seq_len, d_model):
    position = jnp.arange(seq_len, dtype=jnp.float32)[:, None]
    div_term = jnp.exp(jnp.arange(0, d_model, 2, dtype=jnp.float32)
                       * (-math.log(10000.0) / d_model))
    pe = jnp.zeros((seq_len, d_model), jnp.float32)
    pe = pe.at[:, 0::2].set(jnp.sin(position * div_term))
    pe = pe.at[:, 1::2].set(jnp.cos(position * div_term))
    return pe


def init_params(key):
    kemb, *klayers = jax.random.split(key, 1 + NUM_LAYERS)
    params = {
        "emb": 0.02 * jax.random.normal(kemb, (VOCAB, D_MODEL), jnp.float32),
        "final_g": jnp.ones((D_MODEL,), jnp.float32),
        "final_b": jnp.zeros((D_MODEL,), jnp.float32),
        "layers": [],
    }
    for kl in klayers:
        ks = jax.random.split(kl, 6)
        params["layers"].append({
            # Linear weights stored as (in_features, out_features): y = x @ W
            "wq": 0.02 * jax.random.normal(ks[0], (D_MODEL, D_MODEL), jnp.float32),
            "wk": 0.02 * jax.random.normal(ks[1], (D_MODEL, D_MODEL), jnp.float32),
            "wv": 0.02 * jax.random.normal(ks[2], (D_MODEL, D_MODEL), jnp.float32),
            "wo": 0.02 * jax.random.normal(ks[3], (D_MODEL, D_MODEL), jnp.float32),
            "w1": 0.02 * jax.random.normal(ks[4], (D_MODEL, D_FF), jnp.float32),
            "b1": jnp.zeros((D_FF,), jnp.float32),
            "w2": 0.02 * jax.random.normal(ks[5], (D_FF, D_MODEL), jnp.float32),
            "b2": jnp.zeros((D_MODEL,), jnp.float32),
            "g1": jnp.ones((D_MODEL,), jnp.float32),
            "be1": jnp.zeros((D_MODEL,), jnp.float32),
            "g2": jnp.ones((D_MODEL,), jnp.float32),
            "be2": jnp.zeros((D_MODEL,), jnp.float32),
        })
    return params


def _row64(v):
    """Pack a 1-D vector into one zero-padded (1, D_FF) row."""
    v = v.reshape(1, -1)
    return jnp.pad(v, ((0, 0), (0, D_FF - v.shape[1])))


def pack_params(params):
    """Repack params into stacked, kernel-friendly layouts (done once)."""
    inv_sqrt_dk = 1.0 / math.sqrt(D_K)
    wqkv_l, wo_l, w1_l, w2_l, vec_l = [], [], [], [], []
    for lp in params["layers"]:
        # fused QKV weight (D, 3D); Q block pre-scaled by 1/sqrt(d_k);
        # within each block, columns are head-major (head h -> cols h*d_k..)
        wqkv_l.append(jnp.concatenate(
            [lp["wq"] * inv_sqrt_dk, lp["wk"], lp["wv"]], axis=1))   # (D, 3D)
        wo_l.append(lp["wo"])                                        # (D, D)
        w1_l.append(lp["w1"])
        w2_l.append(lp["w2"])
        vec_l.append(jnp.concatenate(
            [_row64(lp["b1"]), _row64(lp["b2"]),
             _row64(lp["g1"]), _row64(lp["be1"]),
             _row64(lp["g2"]), _row64(lp["be2"]),
             jnp.zeros((2, D_FF), jnp.float32)], axis=0))            # (8, D_FF)
    emb = params["emb"]
    embt_pad = jnp.pad(emb.T, ((0, 0), (0, VPAD - VOCAB)))           # (D, 128)
    return {
        "emb": emb,                      # (V, D)   one-hot gather
        "embt_pad": embt_pad,            # (D, 128) tied projection, lane-dense
        "wqkv": jnp.stack(wqkv_l),       # (L, D, 3D)
        "wo": jnp.stack(wo_l),           # (L, D, D)
        "w1": jnp.stack(w1_l),           # (L, D, D_FF)
        "w2": jnp.stack(w2_l),           # (L, D_FF, D)
        "vecs": jnp.stack(vec_l),        # (L, 8, D_FF)
        "fln": jnp.stack([params["final_g"], params["final_b"]]),    # (2, D)
    }


def gpt2_forward(input_ids, packed):
    B, S = input_ids.shape
    total = B * S
    ids_flat = input_ids.reshape(total).astype(jnp.int32)

    pe_tiled = jnp.tile(positional_encoding(S, D_MODEL), (B, 1))     # (total, D)

    # block-diagonal causal additive bias over the folded (B*S) row axis
    r = jnp.arange(total)
    same_batch = (r[:, None] // S) == (r[None, :] // S)
    causal = r[:, None] >= r[None, :]
    attn_bias = jnp.where(same_batch & causal, 0.0, NEG_BIG).astype(jnp.float32)

    smem = pl.BlockSpec(memory_space=pltpu.MemorySpace.SMEM)
    vmem = pl.BlockSpec(memory_space=pltpu.MemorySpace.VMEM)

    logits_pad = pl.pallas_call(
        gpt2_fused_kernel,
        out_shape=jax.ShapeDtypeStruct((total, VPAD), jnp.float32),
        in_specs=[smem] + [vmem] * 10,
        out_specs=vmem,
    )(ids_flat, pe_tiled, attn_bias, packed["emb"], packed["embt_pad"],
      packed["wqkv"], packed["wo"], packed["w1"], packed["w2"],
      packed["vecs"], packed["fln"])

    # drop the lane padding and restore (B, S, V)
    return logits_pad[:, :VOCAB].reshape(B, S, VOCAB)


if __name__ == "__main__":
    key = jax.random.PRNGKey(0)
    kparam, kids = jax.random.split(key)
    params = init_params(kparam)
    packed = pack_params(params)

    B, S = 2, 8
    input_ids = jax.random.randint(kids, (B, S), 0, VOCAB, dtype=jnp.int32)

    fwd = jax.jit(gpt2_forward)
    logits = fwd(input_ids, packed)
    jax.block_until_ready(logits)
    assert logits.shape == (B, S, VOCAB), logits.shape
    print("KERNEL_OK")
</pallas_src>

<mosaic_0001>
module attributes {stable_mosaic.version = 11 : i64} {
  func.func @gpt2_fused_kernel(%arg0: memref<16xi32, #tpu.memory_space<smem>>, %arg1: memref<16x32xf32, #tpu.memory_space<vmem>>, %arg2: memref<16x16xf32, #tpu.memory_space<vmem>>, %arg3: memref<64x32xf32, #tpu.memory_space<vmem>>, %arg4: memref<32x128xf32, #tpu.memory_space<vmem>>, %arg5: memref<2x32x96xf32, #tpu.memory_space<vmem>>, %arg6: memref<2x32x32xf32, #tpu.memory_space<vmem>>, %arg7: memref<2x32x64xf32, #tpu.memory_space<vmem>>, %arg8: memref<2x64x32xf32, #tpu.memory_space<vmem>>, %arg9: memref<2x8x64xf32, #tpu.memory_space<vmem>>, %arg10: memref<2x32xf32, #tpu.memory_space<vmem>>, %arg11: memref<16x128xf32, #tpu.memory_space<vmem>>) attributes {dimension_semantics = [], scalar_prefetch = 0 : i64, scratch_operands = 0 : i64, tpu.core_type = #tpu.core_type<tc>} {
    %0 = tpu.iota {dimensions = array<i32: 0>} : vector<16x64xi32>
    %1 = tpu.iota {dimensions = array<i32: 1>} : vector<16x64xi32>
    %c0_i32 = arith.constant 0 : i32
    %2 = vector.broadcast %c0_i32 : i32 to vector<16x64xi32>
    %c0_i32_0 = arith.constant 0 : i32
    %3 = vector.broadcast %c0_i32_0 : i32 to vector<16x64xi32>
    %4 = arith.cmpi eq, %0, %3 : vector<16x64xi32>
    %c0 = arith.constant 0 : index
    %5 = memref.load %arg0[%c0] : memref<16xi32, #tpu.memory_space<smem>>
    %6 = vector.broadcast %5 : i32 to vector<16x64xi32>
    %7 = arith.select %4, %6, %2 : vector<16x64xi1>, vector<16x64xi32>
    %c1_i32 = arith.constant 1 : i32
    %8 = vector.broadcast %c1_i32 : i32 to vector<16x64xi32>
    %9 = arith.cmpi eq, %0, %8 : vector<16x64xi32>
    %c1 = arith.constant 1 : index
    %10 = memref.load %arg0[%c1] : memref<16xi32, #tpu.memory_space<smem>>
    %11 = vector.broadcast %10 : i32 to vector<16x64xi32>
    %12 = arith.select %9, %11, %7 : vector<16x64xi1>, vector<16x64xi32>
    %c2_i32 = arith.constant 2 : i32
    %13 = vector.broadcast %c2_i32 : i32 to vector<16x64xi32>
    %14 = arith.cmpi eq, %0, %13 : vector<16x64xi32>
    %c2 = arith.constant 2 : index
    %15 = memref.load %arg0[%c2] : memref<16xi32, #tpu.memory_space<smem>>
    %16 = vector.broadcast %15 : i32 to vector<16x64xi32>
    %17 = arith.select %14, %16, %12 : vector<16x64xi1>, vector<16x64xi32>
    %c3_i32 = arith.constant 3 : i32
    %18 = vector.broadcast %c3_i32 : i32 to vector<16x64xi32>
    %19 = arith.cmpi eq, %0, %18 : vector<16x64xi32>
    %c3 = arith.constant 3 : index
    %20 = memref.load %arg0[%c3] : memref<16xi32, #tpu.memory_space<smem>>
    %21 = vector.broadcast %20 : i32 to vector<16x64xi32>
    %22 = arith.select %19, %21, %17 : vector<16x64xi1>, vector<16x64xi32>
    %c4_i32 = arith.constant 4 : i32
    %23 = vector.broadcast %c4_i32 : i32 to vector<16x64xi32>
    %24 = arith.cmpi eq, %0, %23 : vector<16x64xi32>
    %c4 = arith.constant 4 : index
    %25 = memref.load %arg0[%c4] : memref<16xi32, #tpu.memory_space<smem>>
    %26 = vector.broadcast %25 : i32 to vector<16x64xi32>
    %27 = arith.select %24, %26, %22 : vector<16x64xi1>, vector<16x64xi32>
    %c5_i32 = arith.constant 5 : i32
    %28 = vector.broadcast %c5_i32 : i32 to vector<16x64xi32>
    %29 = arith.cmpi eq, %0, %28 : vector<16x64xi32>
    %c5 = arith.constant 5 : index
    %30 = memref.load %arg0[%c5] : memref<16xi32, #tpu.memory_space<smem>>
    %31 = vector.broadcast %30 : i32 to vector<16x64xi32>
    %32 = arith.select %29, %31, %27 : vector<16x64xi1>, vector<16x64xi32>
    %c6_i32 = arith.constant 6 : i32
    %33 = vector.broadcast %c6_i32 : i32 to vector<16x64xi32>
    %34 = arith.cmpi eq, %0, %33 : vector<16x64xi32>
    %c6 = arith.constant 6 : index
    %35 = memref.load %arg0[%c6] : memref<16xi32, #tpu.memory_space<smem>>
    %36 = vector.broadcast %35 : i32 to vector<16x64xi32>
    %37 = arith.select %34, %36, %32 : vector<16x64xi1>, vector<16x64xi32>
    %c7_i32 = arith.constant 7 : i32
    %38 = vector.broadcast %c7_i32 : i32 to vector<16x64xi32>
    %39 = arith.cmpi eq, %0, %38 : vector<16x64xi32>
    %c7 = arith.constant 7 : index
    %40 = memref.load %arg0[%c7] : memref<16xi32, #tpu.memory_space<smem>>
    %41 = vector.broadcast %40 : i32 to vector<16x64xi32>
    %42 = arith.select %39, %41, %37 : vector<16x64xi1>, vector<16x64xi32>
    %c8_i32 = arith.constant 8 : i32
    %43 = vector.broadcast %c8_i32 : i32 to vector<16x64xi32>
    %44 = arith.cmpi eq, %0, %43 : vector<16x64xi32>
    %c8 = arith.constant 8 : index
    %45 = memref.load %arg0[%c8] : memref<16xi32, #tpu.memory_space<smem>>
    %46 = vector.broadcast %45 : i32 to vector<16x64xi32>
    %47 = arith.select %44, %46, %42 : vector<16x64xi1>, vector<16x64xi32>
    %c9_i32 = arith.constant 9 : i32
    %48 = vector.broadcast %c9_i32 : i32 to vector<16x64xi32>
    %49 = arith.cmpi eq, %0, %48 : vector<16x64xi32>
    %c9 = arith.constant 9 : index
    %50 = memref.load %arg0[%c9] : memref<16xi32, #tpu.memory_space<smem>>
    %51 = vector.broadcast %50 : i32 to vector<16x64xi32>
    %52 = arith.select %49, %51, %47 : vector<16x64xi1>, vector<16x64xi32>
    %c10_i32 = arith.constant 10 : i32
    %53 = vector.broadcast %c10_i32 : i32 to vector<16x64xi32>
    %54 = arith.cmpi eq, %0, %53 : vector<16x64xi32>
    %c10 = arith.constant 10 : index
    %55 = memref.load %arg0[%c10] : memref<16xi32, #tpu.memory_space<smem>>
    %56 = vector.broadcast %55 : i32 to vector<16x64xi32>
    %57 = arith.select %54, %56, %52 : vector<16x64xi1>, vector<16x64xi32>
    %c11_i32 = arith.constant 11 : i32
    %58 = vector.broadcast %c11_i32 : i32 to vector<16x64xi32>
    %59 = arith.cmpi eq, %0, %58 : vector<16x64xi32>
    %c11 = arith.constant 11 : index
    %60 = memref.load %arg0[%c11] : memref<16xi32, #tpu.memory_space<smem>>
    %61 = vector.broadcast %60 : i32 to vector<16x64xi32>
    %62 = arith.select %59, %61, %57 : vector<16x64xi1>, vector<16x64xi32>
    %c12_i32 = arith.constant 12 : i32
    %63 = vector.broadcast %c12_i32 : i32 to vector<16x64xi32>
    %64 = arith.cmpi eq, %0, %63 : vector<16x64xi32>
    %c12 = arith.constant 12 : index
    %65 = memref.load %arg0[%c12] : memref<16xi32, #tpu.memory_space<smem>>
    %66 = vector.broadcast %65 : i32 to vector<16x64xi32>
    %67 = arith.select %64, %66, %62 : vector<16x64xi1>, vector<16x64xi32>
    %c13_i32 = arith.constant 13 : i32
    %68 = vector.broadcast %c13_i32 : i32 to vector<16x64xi32>
    %69 = arith.cmpi eq, %0, %68 : vector<16x64xi32>
    %c13 = arith.constant 13 : index
    %70 = memref.load %arg0[%c13] : memref<16xi32, #tpu.memory_space<smem>>
    %71 = vector.broadcast %70 : i32 to vector<16x64xi32>
    %72 = arith.select %69, %71, %67 : vector<16x64xi1>, vector<16x64xi32>
    %c14_i32 = arith.constant 14 : i32
    %73 = vector.broadcast %c14_i32 : i32 to vector<16x64xi32>
    %74 = arith.cmpi eq, %0, %73 : vector<16x64xi32>
    %c14 = arith.constant 14 : index
    %75 = memref.load %arg0[%c14] : memref<16xi32, #tpu.memory_space<smem>>
    %76 = vector.broadcast %75 : i32 to vector<16x64xi32>
    %77 = arith.select %74, %76, %72 : vector<16x64xi1>, vector<16x64xi32>
    %c15_i32 = arith.constant 15 : i32
    %78 = vector.broadcast %c15_i32 : i32 to vector<16x64xi32>
    %79 = arith.cmpi eq, %0, %78 : vector<16x64xi32>
    %c15 = arith.constant 15 : index
    %80 = memref.load %arg0[%c15] : memref<16xi32, #tpu.memory_space<smem>>
    %81 = vector.broadcast %80 : i32 to vector<16x64xi32>
    %82 = arith.select %79, %81, %77 : vector<16x64xi1>, vector<16x64xi32>
    %83 = arith.cmpi eq, %82, %1 : vector<16x64xi32>
    %84 = arith.extui %83 : vector<16x64xi1> to vector<16x64xi32>
    %85 = arith.sitofp %84 : vector<16x64xi32> to vector<16x64xf32>
    %c0_1 = arith.constant 0 : index
    %c0_2 = arith.constant 0 : index
    %86 = vector.load %arg3[%c0_1, %c0_2] : memref<64x32xf32, #tpu.memory_space<vmem>>, vector<64x32xf32>
    %cst = arith.constant dense<0.000000e+00> : vector<16x32xf32>
    %87 = tpu.matmul %85, %86, %cst {dimension_numbers = #tpu.dot_dimension_numbers<[1], [0], [0], [1], [0, 0, 1, 1], [], []>} : vector<16x64xf32>, vector<64x32xf32>, vector<16x32xf32> -> vector<16x32xf32>
    %cst_3 = arith.constant 5.65685415 : f32
    %88 = vector.broadcast %cst_3 : f32 to vector<16x32xf32>
    %89 = arith.mulf %87, %88 : vector<16x32xf32>
    %c0_4 = arith.constant 0 : index
    %c0_5 = arith.constant 0 : index
    %90 = vector.load %arg1[%c0_4, %c0_5] : memref<16x32xf32, #tpu.memory_space<vmem>>, vector<16x32xf32>
    %91 = arith.addf %89, %90 : vector<16x32xf32>
    %c0_6 = arith.constant 0 : index
    %c0_7 = arith.constant 0 : index
    %92 = vector.load %arg2[%c0_6, %c0_7] : memref<16x16xf32, #tpu.memory_space<vmem>>, vector<16x16xf32>
    %c0_8 = arith.constant 0 : index
    %c0_9 = arith.constant 0 : index
    %c0_10 = arith.constant 0 : index
    %93 = vector.load %arg5[%c0_8, %c0_9, %c0_10] : memref<2x32x96xf32, #tpu.memory_space<vmem>>, vector<1x32x96xf32>
    %94 = vector.shape_cast %93 : vector<1x32x96xf32> to vector<32x96xf32>
    %cst_11 = arith.constant dense<0.000000e+00> : vector<16x96xf32>
    %95 = tpu.matmul %91, %94, %cst_11 {dimension_numbers = #tpu.dot_dimension_numbers<[1], [0], [0], [1], [0, 0, 1, 1], [], []>} : vector<16x32xf32>, vector<32x96xf32>, vector<16x96xf32> -> vector<16x96xf32>
    %96 = vector.extract_strided_slice %95 {offsets = [0, 0], sizes = [16, 32], strides = [1, 1]} : vector<16x96xf32> to vector<16x32xf32>
    %97 = vector.extract_strided_slice %95 {offsets = [0, 32], sizes = [16, 32], strides = [1, 1]} : vector<16x96xf32> to vector<16x32xf32>
    %98 = vector.extract_strided_slice %95 {offsets = [0, 64], sizes = [16, 32], strides = [1, 1]} : vector<16x96xf32> to vector<16x32xf32>
    %99 = vector.extract_strided_slice %96 {offsets = [0, 0], sizes = [16, 8], strides = [1, 1]} : vector<16x32xf32> to vector<16x8xf32>
    %100 = vector.extract_strided_slice %96 {offsets = [0, 8], sizes = [16, 8], strides = [1, 1]} : vector<16x32xf32> to vector<16x8xf32>
    %101 = vector.extract_strided_slice %96 {offsets = [0, 16], sizes = [16, 8], strides = [1, 1]} : vector<16x32xf32> to vector<16x8xf32>
    %102 = vector.extract_strided_slice %96 {offsets = [0, 24], sizes = [16, 8], strides = [1, 1]} : vector<16x32xf32> to vector<16x8xf32>
    %103 = vector.shape_cast %99 : vector<16x8xf32> to vector<1x16x8xf32>
    %104 = vector.shape_cast %100 : vector<16x8xf32> to vector<1x16x8xf32>
    %105 = vector.shape_cast %101 : vector<16x8xf32> to vector<1x16x8xf32>
    %106 = vector.shape_cast %102 : vector<16x8xf32> to vector<1x16x8xf32>
    %107 = tpu.concatenate %103, %104, %105, %106 in 0 : vector<1x16x8xf32>, vector<1x16x8xf32>, vector<1x16x8xf32>, vector<1x16x8xf32> -> vector<4x16x8xf32>
    %108 = vector.extract_strided_slice %97 {offsets = [0, 0], sizes = [16, 8], strides = [1, 1]} : vector<16x32xf32> to vector<16x8xf32>
    %109 = vector.extract_strided_slice %97 {offsets = [0, 8], sizes = [16, 8], strides = [1, 1]} : vector<16x32xf32> to vector<16x8xf32>
    %110 = vector.extract_strided_slice %97 {offsets = [0, 16], sizes = [16, 8], strides = [1, 1]} : vector<16x32xf32> to vector<16x8xf32>
    %111 = vector.extract_strided_slice %97 {offsets = [0, 24], sizes = [16, 8], strides = [1, 1]} : vector<16x32xf32> to vector<16x8xf32>
    %112 = vector.shape_cast %108 : vector<16x8xf32> to vector<1x16x8xf32>
    %113 = vector.shape_cast %109 : vector<16x8xf32> to vector<1x16x8xf32>
    %114 = vector.shape_cast %110 : vector<16x8xf32> to vector<1x16x8xf32>
    %115 = vector.shape_cast %111 : vector<16x8xf32> to vector<1x16x8xf32>
    %116 = tpu.concatenate %112, %113, %114, %115 in 0 : vector<1x16x8xf32>, vector<1x16x8xf32>, vector<1x16x8xf32>, vector<1x16x8xf32> -> vector<4x16x8xf32>
    %117 = vector.extract_strided_slice %98 {offsets = [0, 0], sizes = [16, 8], strides = [1, 1]} : vector<16x32xf32> to vector<16x8xf32>
    %118 = vector.extract_strided_slice %98 {offsets = [0, 8], sizes = [16, 8], strides = [1, 1]} : vector<16x32xf32> to vector<16x8xf32>
    %119 = vector.extract_strided_slice %98 {offsets = [0, 16], sizes = [16, 8], strides = [1, 1]} : vector<16x32xf32> to vector<16x8xf32>
    %120 = vector.extract_strided_slice %98 {offsets = [0, 24], sizes = [16, 8], strides = [1, 1]} : vector<16x32xf32> to vector<16x8xf32>
    %121 = vector.shape_cast %117 : vector<16x8xf32> to vector<1x16x8xf32>
    %122 = vector.shape_cast %118 : vector<16x8xf32> to vector<1x16x8xf32>
    %123 = vector.shape_cast %119 : vector<16x8xf32> to vector<1x16x8xf32>
    %124 = vector.shape_cast %120 : vector<16x8xf32> to vector<1x16x8xf32>
    %125 = tpu.concatenate %121, %122, %123, %124 in 0 : vector<1x16x8xf32>, vector<1x16x8xf32>, vector<1x16x8xf32>, vector<1x16x8xf32> -> vector<4x16x8xf32>
    "tpu.trace_start"() <{level = 10 : i32, message = "hqd,hkd->hqk"}> : () -> ()
    %cst_12 = arith.constant dense<0.000000e+00> : vector<4x16x16xf32>
    %126 = tpu.matmul %107, %116, %cst_12 {dimension_numbers = #tpu.dot_dimension_numbers<[2], [2], [1], [1], [0, 0, 0, 1, 1, 1], [0], [0]>} : vector<4x16x8xf32>, vector<4x16x8xf32>, vector<4x16x16xf32> -> vector<4x16x16xf32>
    "tpu.trace_stop"() : () -> ()
    %127 = vector.shape_cast %92 : vector<16x16xf32> to vector<1x16x16xf32>
    %128 = vector.broadcast %127 : vector<1x16x16xf32> to vector<4x16x16xf32>
    %129 = arith.addf %126, %128 : vector<4x16x16xf32>
    %cst_13 = arith.constant dense<0xFF800000> : vector<4x16xf32>
    %130 = vector.multi_reduction <maximumf>, %129, %cst_13 [2] : vector<4x16x16xf32> to vector<4x16xf32>
    %131 = vector.shape_cast %130 : vector<4x16xf32> to vector<4x16x1xf32>
    %132 = vector.broadcast %131 : vector<4x16x1xf32> to vector<4x16x16xf32>
    %133 = arith.subf %129, %132 : vector<4x16x16xf32>
    %134 = math.exp %133 : vector<4x16x16xf32>
    %cst_14 = arith.constant dense<0.000000e+00> : vector<4x16xf32>
    %135 = vector.multi_reduction <add>, %134, %cst_14 [2] : vector<4x16x16xf32> to vector<4x16xf32>
    %136 = vector.shape_cast %135 : vector<4x16xf32> to vector<4x16x1xf32>
    %137 = tpu.reciprocal %136 {approx = true} : vector<4x16x1xf32> -> vector<4x16x1xf32>
    %138 = vector.broadcast %137 : vector<4x16x1xf32> to vector<4x16x16xf32>
    %139 = arith.mulf %134, %138 : vector<4x16x16xf32>
    "tpu.trace_start"() <{level = 10 : i32, message = "hqk,hkd->hqd"}> : () -> ()
    %cst_15 = arith.constant dense<0.000000e+00> : vector<4x16x8xf32>
    %140 = tpu.matmul %139, %125, %cst_15 {dimension_numbers = #tpu.dot_dimension_numbers<[2], [1], [1], [2], [0, 0, 0, 1, 1, 2], [0], [0]>} : vector<4x16x16xf32>, vector<4x16x8xf32>, vector<4x16x8xf32> -> vector<4x16x8xf32>
    "tpu.trace_stop"() : () -> ()
    %141 = vector.extract_strided_slice %140 {offsets = [0, 0, 0], sizes = [1, 16, 8], strides = [1, 1, 1]} : vector<4x16x8xf32> to vector<1x16x8xf32>
    %142 = vector.shape_cast %141 : vector<1x16x8xf32> to vector<16x8xf32>
    %143 = vector.extract_strided_slice %140 {offsets = [1, 0, 0], sizes = [1, 16, 8], strides = [1, 1, 1]} : vector<4x16x8xf32> to vector<1x16x8xf32>
    %144 = vector.shape_cast %143 : vector<1x16x8xf32> to vector<16x8xf32>
    %145 = vector.extract_strided_slice %140 {offsets = [2, 0, 0], sizes = [1, 16, 8], strides = [1, 1, 1]} : vector<4x16x8xf32> to vector<1x16x8xf32>
    %146 = vector.shape_cast %145 : vector<1x16x8xf32> to vector<16x8xf32>
    %147 = vector.extract_strided_slice %140 {offsets = [3, 0, 0], sizes = [1, 16, 8], strides = [1, 1, 1]} : vector<4x16x8xf32> to vector<1x16x8xf32>
    %148 = vector.shape_cast %147 : vector<1x16x8xf32> to vector<16x8xf32>
    %149 = tpu.concatenate %142, %144, %146, %148 in 1 : vector<16x8xf32>, vector<16x8xf32>, vector<16x8xf32>, vector<16x8xf32> -> vector<16x32xf32>
    %c0_16 = arith.constant 0 : index
    %c0_17 = arith.constant 0 : index
    %c0_18 = arith.constant 0 : index
    %150 = vector.load %arg6[%c0_16, %c0_17, %c0_18] : memref<2x32x32xf32, #tpu.memory_space<vmem>>, vector<1x32x32xf32>
    %151 = vector.shape_cast %150 : vector<1x32x32xf32> to vector<32x32xf32>
    %cst_19 = arith.constant dense<0.000000e+00> : vector<16x32xf32>
    %152 = tpu.matmul %149, %151, %cst_19 {dimension_numbers = #tpu.dot_dimension_numbers<[1], [0], [0], [1], [0, 0, 1, 1], [], []>} : vector<16x32xf32>, vector<32x32xf32>, vector<16x32xf32> -> vector<16x32xf32>
    %c0_20 = arith.constant 0 : index
    %c0_21 = arith.constant 0 : index
    %c0_22 = arith.constant 0 : index
    %153 = vector.load %arg9[%c0_20, %c0_21, %c0_22] : memref<2x8x64xf32, #tpu.memory_space<vmem>>, vector<1x8x64xf32>
    %154 = vector.shape_cast %153 : vector<1x8x64xf32> to vector<8x64xf32>
    %155 = vector.extract_strided_slice %154 {offsets = [0, 0], sizes = [1, 64], strides = [1, 1]} : vector<8x64xf32> to vector<1x64xf32>
    %156 = vector.extract_strided_slice %154 {offsets = [1, 0], sizes = [1, 32], strides = [1, 1]} : vector<8x64xf32> to vector<1x32xf32>
    %157 = vector.extract_strided_slice %154 {offsets = [2, 0], sizes = [1, 32], strides = [1, 1]} : vector<8x64xf32> to vector<1x32xf32>
    %158 = vector.extract_strided_slice %154 {offsets = [3, 0], sizes = [1, 32], strides = [1, 1]} : vector<8x64xf32> to vector<1x32xf32>
    %159 = vector.extract_strided_slice %154 {offsets = [4, 0], sizes = [1, 32], strides = [1, 1]} : vector<8x64xf32> to vector<1x32xf32>
    %160 = vector.extract_strided_slice %154 {offsets = [5, 0], sizes = [1, 32], strides = [1, 1]} : vector<8x64xf32> to vector<1x32xf32>
    %161 = arith.addf %91, %152 : vector<16x32xf32>
    %cst_23 = arith.constant dense<0.000000e+00> : vector<16xf32>
    %162 = vector.multi_reduction <add>, %161, %cst_23 [1] : vector<16x32xf32> to vector<16xf32>
    %163 = vector.shape_cast %162 : vector<16xf32> to vector<16x1xf32>
    %cst_24 = arith.constant 3.200000e+01 : f32
    %164 = vector.broadcast %cst_24 : f32 to vector<16x1xf32>
    %165 = arith.divf %163, %164 : vector<16x1xf32>
    %166 = vector.broadcast %165 : vector<16x1xf32> to vector<16x32xf32>
    %167 = arith.subf %161, %166 : vector<16x32xf32>
    %168 = arith.mulf %167, %167 : vector<16x32xf32>
    %cst_25 = arith.constant dense<0.000000e+00> : vector<16xf32>
    %169 = vector.multi_reduction <add>, %168, %cst_25 [1] : vector<16x32xf32> to vector<16xf32>
    %170 = vector.shape_cast %169 : vector<16xf32> to vector<16x1xf32>
    %cst_26 = arith.constant 3.200000e+01 : f32
    %171 = vector.broadcast %cst_26 : f32 to vector<16x1xf32>
    %172 = arith.divf %170, %171 : vector<16x1xf32>
    %173 = vector.broadcast %165 : vector<16x1xf32> to vector<16x32xf32>
    %174 = arith.subf %161, %173 : vector<16x32xf32>
    %cst_27 = arith.constant 9.99999974E-6 : f32
    %175 = vector.broadcast %cst_27 : f32 to vector<16x1xf32>
    %176 = arith.addf %172, %175 : vector<16x1xf32>
    %177 = math.rsqrt %176 : vector<16x1xf32>
    %178 = vector.broadcast %177 : vector<16x1xf32> to vector<16x32xf32>
    %179 = arith.mulf %174, %178 : vector<16x32xf32>
    %180 = vector.broadcast %157 : vector<1x32xf32> to vector<16x32xf32>
    %181 = arith.mulf %179, %180 : vector<16x32xf32>
    %182 = vector.broadcast %158 : vector<1x32xf32> to vector<16x32xf32>
    %183 = arith.addf %181, %182 : vector<16x32xf32>
    %c0_28 = arith.constant 0 : index
    %c0_29 = arith.constant 0 : index
    %c0_30 = arith.constant 0 : index
    %184 = vector.load %arg7[%c0_28, %c0_29, %c0_30] : memref<2x32x64xf32, #tpu.memory_space<vmem>>, vector<1x32x64xf32>
    %185 = vector.shape_cast %184 : vector<1x32x64xf32> to vector<32x64xf32>
    %cst_31 = arith.constant dense<0.000000e+00> : vector<16x64xf32>
    %186 = tpu.matmul %183, %185, %cst_31 {dimension_numbers = #tpu.dot_dimension_numbers<[1], [0], [0], [1], [0, 0, 1, 1], [], []>} : vector<16x32xf32>, vector<32x64xf32>, vector<16x64xf32> -> vector<16x64xf32>
    %187 = vector.broadcast %155 : vector<1x64xf32> to vector<16x64xf32>
    %188 = arith.addf %186, %187 : vector<16x64xf32>
    %cst_32 = arith.constant 5.000000e-01 : f32
    %189 = vector.broadcast %cst_32 : f32 to vector<16x64xf32>
    %190 = arith.mulf %189, %188 : vector<16x64xf32>
    %cst_33 = arith.constant 0.707106769 : f32
    %191 = vector.broadcast %cst_33 : f32 to vector<16x64xf32>
    %192 = arith.mulf %188, %191 : vector<16x64xf32>
    %193 = math.erf %192 : vector<16x64xf32>
    %cst_34 = arith.constant 1.000000e+00 : f32
    %194 = vector.broadcast %cst_34 : f32 to vector<16x64xf32>
    %195 = arith.addf %194, %193 : vector<16x64xf32>
    %196 = arith.mulf %190, %195 : vector<16x64xf32>
    %c0_35 = arith.constant 0 : index
    %c0_36 = arith.constant 0 : index
    %c0_37 = arith.constant 0 : index
    %197 = vector.load %arg8[%c0_35, %c0_36, %c0_37] : memref<2x64x32xf32, #tpu.memory_space<vmem>>, vector<1x64x32xf32>
    %198 = vector.shape_cast %197 : vector<1x64x32xf32> to vector<64x32xf32>
    %cst_38 = arith.constant dense<0.000000e+00> : vector<16x32xf32>
    %199 = tpu.matmul %196, %198, %cst_38 {dimension_numbers = #tpu.dot_dimension_numbers<[1], [0], [0], [1], [0, 0, 1, 1], [], []>} : vector<16x64xf32>, vector<64x32xf32>, vector<16x32xf32> -> vector<16x32xf32>
    %200 = vector.broadcast %156 : vector<1x32xf32> to vector<16x32xf32>
    %201 = arith.addf %199, %200 : vector<16x32xf32>
    %202 = arith.addf %183, %201 : vector<16x32xf32>
    %cst_39 = arith.constant dense<0.000000e+00> : vector<16xf32>
    %203 = vector.multi_reduction <add>, %202, %cst_39 [1] : vector<16x32xf32> to vector<16xf32>
    %204 = vector.shape_cast %203 : vector<16xf32> to vector<16x1xf32>
    %cst_40 = arith.constant 3.200000e+01 : f32
    %205 = vector.broadcast %cst_40 : f32 to vector<16x1xf32>
    %206 = arith.divf %204, %205 : vector<16x1xf32>
    %207 = vector.broadcast %206 : vector<16x1xf32> to vector<16x32xf32>
    %208 = arith.subf %202, %207 : vector<16x32xf32>
    %209 = arith.mulf %208, %208 : vector<16x32xf32>
    %cst_41 = arith.constant dense<0.000000e+00> : vector<16xf32>
    %210 = vector.multi_reduction <add>, %209, %cst_41 [1] : vector<16x32xf32> to vector<16xf32>
    %211 = vector.shape_cast %210 : vector<16xf32> to vector<16x1xf32>
    %cst_42 = arith.constant 3.200000e+01 : f32
    %212 = vector.broadcast %cst_42 : f32 to vector<16x1xf32>
    %213 = arith.divf %211, %212 : vector<16x1xf32>
    %214 = vector.broadcast %206 : vector<16x1xf32> to vector<16x32xf32>
    %215 = arith.subf %202, %214 : vector<16x32xf32>
    %cst_43 = arith.constant 9.99999974E-6 : f32
    %216 = vector.broadcast %cst_43 : f32 to vector<16x1xf32>
    %217 = arith.addf %213, %216 : vector<16x1xf32>
    %218 = math.rsqrt %217 : vector<16x1xf32>
    %219 = vector.broadcast %218 : vector<16x1xf32> to vector<16x32xf32>
    %220 = arith.mulf %215, %219 : vector<16x32xf32>
    %221 = vector.broadcast %159 : vector<1x32xf32> to vector<16x32xf32>
    %222 = arith.mulf %220, %221 : vector<16x32xf32>
    %223 = vector.broadcast %160 : vector<1x32xf32> to vector<16x32xf32>
    %224 = arith.addf %222, %223 : vector<16x32xf32>
    %c1_44 = arith.constant 1 : index
    %c0_45 = arith.constant 0 : index
    %c0_46 = arith.constant 0 : index
    %225 = vector.load %arg5[%c1_44, %c0_45, %c0_46] : memref<2x32x96xf32, #tpu.memory_space<vmem>>, vector<1x32x96xf32>
    %226 = vector.shape_cast %225 : vector<1x32x96xf32> to vector<32x96xf32>
    %cst_47 = arith.constant dense<0.000000e+00> : vector<16x96xf32>
    %227 = tpu.matmul %224, %226, %cst_47 {dimension_numbers = #tpu.dot_dimension_numbers<[1], [0], [0], [1], [0, 0, 1, 1], [], []>} : vector<16x32xf32>, vector<32x96xf32>, vector<16x96xf32> -> vector<16x96xf32>
    %228 = vector.extract_strided_slice %227 {offsets = [0, 0], sizes = [16, 32], strides = [1, 1]} : vector<16x96xf32> to vector<16x32xf32>
    %229 = vector.extract_strided_slice %227 {offsets = [0, 32], sizes = [16, 32], strides = [1, 1]} : vector<16x96xf32> to vector<16x32xf32>
    %230 = vector.extract_strided_slice %227 {offsets = [0, 64], sizes = [16, 32], strides = [1, 1]} : vector<16x96xf32> to vector<16x32xf32>
    %231 = vector.extract_strided_slice %228 {offsets = [0, 0], sizes = [16, 8], strides = [1, 1]} : vector<16x32xf32> to vector<16x8xf32>
    %232 = vector.extract_strided_slice %228 {offsets = [0, 8], sizes = [16, 8], strides = [1, 1]} : vector<16x32xf32> to vector<16x8xf32>
    %233 = vector.extract_strided_slice %228 {offsets = [0, 16], sizes = [16, 8], strides = [1, 1]} : vector<16x32xf32> to vector<16x8xf32>
    %234 = vector.extract_strided_slice %228 {offsets = [0, 24], sizes = [16, 8], strides = [1, 1]} : vector<16x32xf32> to vector<16x8xf32>
    %235 = vector.shape_cast %231 : vector<16x8xf32> to vector<1x16x8xf32>
    %236 = vector.shape_cast %232 : vector<16x8xf32> to vector<1x16x8xf32>
    %237 = vector.shape_cast %233 : vector<16x8xf32> to vector<1x16x8xf32>
    %238 = vector.shape_cast %234 : vector<16x8xf32> to vector<1x16x8xf32>
    %239 = tpu.concatenate %235, %236, %237, %238 in 0 : vector<1x16x8xf32>, vector<1x16x8xf32>, vector<1x16x8xf32>, vector<1x16x8xf32> -> vector<4x16x8xf32>
    %240 = vector.extract_strided_slice %229 {offsets = [0, 0], sizes = [16, 8], strides = [1, 1]} : vector<16x32xf32> to vector<16x8xf32>
    %241 = vector.extract_strided_slice %229 {offsets = [0, 8], sizes = [16, 8], strides = [1, 1]} : vector<16x32xf32> to vector<16x8xf32>
    %242 = vector.extract_strided_slice %229 {offsets = [0, 16], sizes = [16, 8], strides = [1, 1]} : vector<16x32xf32> to vector<16x8xf32>
    %243 = vector.extract_strided_slice %229 {offsets = [0, 24], sizes = [16, 8], strides = [1, 1]} : vector<16x32xf32> to vector<16x8xf32>
    %244 = vector.shape_cast %240 : vector<16x8xf32> to vector<1x16x8xf32>
    %245 = vector.shape_cast %241 : vector<16x8xf32> to vector<1x16x8xf32>
    %246 = vector.shape_cast %242 : vector<16x8xf32> to vector<1x16x8xf32>
    %247 = vector.shape_cast %243 : vector<16x8xf32> to vector<1x16x8xf32>
    %248 = tpu.concatenate %244, %245, %246, %247 in 0 : vector<1x16x8xf32>, vector<1x16x8xf32>, vector<1x16x8xf32>, vector<1x16x8xf32> -> vector<4x16x8xf32>
    %249 = vector.extract_strided_slice %230 {offsets = [0, 0], sizes = [16, 8], strides = [1, 1]} : vector<16x32xf32> to vector<16x8xf32>
    %250 = vector.extract_strided_slice %230 {offsets = [0, 8], sizes = [16, 8], strides = [1, 1]} : vector<16x32xf32> to vector<16x8xf32>
    %251 = vector.extract_strided_slice %230 {offsets = [0, 16], sizes = [16, 8], strides = [1, 1]} : vector<16x32xf32> to vector<16x8xf32>
    %252 = vector.extract_strided_slice %230 {offsets = [0, 24], sizes = [16, 8], strides = [1, 1]} : vector<16x32xf32> to vector<16x8xf32>
    %253 = vector.shape_cast %249 : vector<16x8xf32> to vector<1x16x8xf32>
    %254 = vector.shape_cast %250 : vector<16x8xf32> to vector<1x16x8xf32>
    %255 = vector.shape_cast %251 : vector<16x8xf32> to vector<1x16x8xf32>
    %256 = vector.shape_cast %252 : vector<16x8xf32> to vector<1x16x8xf32>
    %257 = tpu.concatenate %253, %254, %255, %256 in 0 : vector<1x16x8xf32>, vector<1x16x8xf32>, vector<1x16x8xf32>, vector<1x16x8xf32> -> vector<4x16x8xf32>
    "tpu.trace_start"() <{level = 10 : i32, message = "hqd,hkd->hqk"}> : () -> ()
    %cst_48 = arith.constant dense<0.000000e+00> : vector<4x16x16xf32>
    %258 = tpu.matmul %239, %248, %cst_48 {dimension_numbers = #tpu.dot_dimension_numbers<[2], [2], [1], [1], [0, 0, 0, 1, 1, 1], [0], [0]>} : vector<4x16x8xf32>, vector<4x16x8xf32>, vector<4x16x16xf32> -> vector<4x16x16xf32>
    "tpu.trace_stop"() : () -> ()
    %259 = vector.shape_cast %92 : vector<16x16xf32> to vector<1x16x16xf32>
    %260 = vector.broadcast %259 : vector<1x16x16xf32> to vector<4x16x16xf32>
    %261 = arith.addf %258, %260 : vector<4x16x16xf32>
    %cst_49 = arith.constant dense<0xFF800000> : vector<4x16xf32>
    %262 = vector.multi_reduction <maximumf>, %261, %cst_49 [2] : vector<4x16x16xf32> to vector<4x16xf32>
    %263 = vector.shape_cast %262 : vector<4x16xf32> to vector<4x16x1xf32>
    %264 = vector.broadcast %263 : vector<4x16x1xf32> to vector<4x16x16xf32>
    %265 = arith.subf %261, %264 : vector<4x16x16xf32>
    %266 = math.exp %265 : vector<4x16x16xf32>
    %cst_50 = arith.constant dense<0.000000e+00> : vector<4x16xf32>
    %267 = vector.multi_reduction <add>, %266, %cst_50 [2] : vector<4x16x16xf32> to vector<4x16xf32>
    %268 = vector.shape_cast %267 : vector<4x16xf32> to vector<4x16x1xf32>
    %269 = tpu.reciprocal %268 {approx = true} : vector<4x16x1xf32> -> vector<4x16x1xf32>
    %270 = vector.broadcast %269 : vector<4x16x1xf32> to vector<4x16x16xf32>
    %271 = arith.mulf %266, %270 : vector<4x16x16xf32>
    "tpu.trace_start"() <{level = 10 : i32, message = "hqk,hkd->hqd"}> : () -> ()
    %cst_51 = arith.constant dense<0.000000e+00> : vector<4x16x8xf32>
    %272 = tpu.matmul %271, %257, %cst_51 {dimension_numbers = #tpu.dot_dimension_numbers<[2], [1], [1], [2], [0, 0, 0, 1, 1, 2], [0], [0]>} : vector<4x16x16xf32>, vector<4x16x8xf32>, vector<4x16x8xf32> -> vector<4x16x8xf32>
    "tpu.trace_stop"() : () -> ()
    %273 = vector.extract_strided_slice %272 {offsets = [0, 0, 0], sizes = [1, 16, 8], strides = [1, 1, 1]} : vector<4x16x8xf32> to vector<1x16x8xf32>
    %274 = vector.shape_cast %273 : vector<1x16x8xf32> to vector<16x8xf32>
    %275 = vector.extract_strided_slice %272 {offsets = [1, 0, 0], sizes = [1, 16, 8], strides = [1, 1, 1]} : vector<4x16x8xf32> to vector<1x16x8xf32>
    %276 = vector.shape_cast %275 : vector<1x16x8xf32> to vector<16x8xf32>
    %277 = vector.extract_strided_slice %272 {offsets = [2, 0, 0], sizes = [1, 16, 8], strides = [1, 1, 1]} : vector<4x16x8xf32> to vector<1x16x8xf32>
    %278 = vector.shape_cast %277 : vector<1x16x8xf32> to vector<16x8xf32>
    %279 = vector.extract_strided_slice %272 {offsets = [3, 0, 0], sizes = [1, 16, 8], strides = [1, 1, 1]} : vector<4x16x8xf32> to vector<1x16x8xf32>
    %280 = vector.shape_cast %279 : vector<1x16x8xf32> to vector<16x8xf32>
    %281 = tpu.concatenate %274, %276, %278, %280 in 1 : vector<16x8xf32>, vector<16x8xf32>, vector<16x8xf32>, vector<16x8xf32> -> vector<16x32xf32>
    %c1_52 = arith.constant 1 : index
    %c0_53 = arith.constant 0 : index
    %c0_54 = arith.constant 0 : index
    %282 = vector.load %arg6[%c1_52, %c0_53, %c0_54] : memref<2x32x32xf32, #tpu.memory_space<vmem>>, vector<1x32x32xf32>
    %283 = vector.shape_cast %282 : vector<1x32x32xf32> to vector<32x32xf32>
    %cst_55 = arith.constant dense<0.000000e+00> : vector<16x32xf32>
    %284 = tpu.matmul %281, %283, %cst_55 {dimension_numbers = #tpu.dot_dimension_numbers<[1], [0], [0], [1], [0, 0, 1, 1], [], []>} : vector<16x32xf32>, vector<32x32xf32>, vector<16x32xf32> -> vector<16x32xf32>
    %c1_56 = arith.constant 1 : index
    %c0_57 = arith.constant 0 : index
    %c0_58 = arith.constant 0 : index
    %285 = vector.load %arg9[%c1_56, %c0_57, %c0_58] : memref<2x8x64xf32, #tpu.memory_space<vmem>>, vector<1x8x64xf32>
    %286 = vector.shape_cast %285 : vector<1x8x64xf32> to vector<8x64xf32>
    %287 = vector.extract_strided_slice %286 {offsets = [0, 0], sizes = [1, 64], strides = [1, 1]} : vector<8x64xf32> to vector<1x64xf32>
    %288 = vector.extract_strided_slice %286 {offsets = [1, 0], sizes = [1, 32], strides = [1, 1]} : vector<8x64xf32> to vector<1x32xf32>
    %289 = vector.extract_strided_slice %286 {offsets = [2, 0], sizes = [1, 32], strides = [1, 1]} : vector<8x64xf32> to vector<1x32xf32>
    %290 = vector.extract_strided_slice %286 {offsets = [3, 0], sizes = [1, 32], strides = [1, 1]} : vector<8x64xf32> to vector<1x32xf32>
    %291 = vector.extract_strided_slice %286 {offsets = [4, 0], sizes = [1, 32], strides = [1, 1]} : vector<8x64xf32> to vector<1x32xf32>
    %292 = vector.extract_strided_slice %286 {offsets = [5, 0], sizes = [1, 32], strides = [1, 1]} : vector<8x64xf32> to vector<1x32xf32>
    %293 = arith.addf %224, %284 : vector<16x32xf32>
    %cst_59 = arith.constant dense<0.000000e+00> : vector<16xf32>
    %294 = vector.multi_reduction <add>, %293, %cst_59 [1] : vector<16x32xf32> to vector<16xf32>
    %295 = vector.shape_cast %294 : vector<16xf32> to vector<16x1xf32>
    %cst_60 = arith.constant 3.200000e+01 : f32
    %296 = vector.broadcast %cst_60 : f32 to vector<16x1xf32>
    %297 = arith.divf %295, %296 : vector<16x1xf32>
    %298 = vector.broadcast %297 : vector<16x1xf32> to vector<16x32xf32>
    %299 = arith.subf %293, %298 : vector<16x32xf32>
    %300 = arith.mulf %299, %299 : vector<16x32xf32>
    %cst_61 = arith.constant dense<0.000000e+00> : vector<16xf32>
    %301 = vector.multi_reduction <add>, %300, %cst_61 [1] : vector<16x32xf32> to vector<16xf32>
    %302 = vector.shape_cast %301 : vector<16xf32> to vector<16x1xf32>
    %cst_62 = arith.constant 3.200000e+01 : f32
    %303 = vector.broadcast %cst_62 : f32 to vector<16x1xf32>
    %304 = arith.divf %302, %303 : vector<16x1xf32>
    %305 = vector.broadcast %297 : vector<16x1xf32> to vector<16x32xf32>
    %306 = arith.subf %293, %305 : vector<16x32xf32>
    %cst_63 = arith.constant 9.99999974E-6 : f32
    %307 = vector.broadcast %cst_63 : f32 to vector<16x1xf32>
    %308 = arith.addf %304, %307 : vector<16x1xf32>
    %309 = math.rsqrt %308 : vector<16x1xf32>
    %310 = vector.broadcast %309 : vector<16x1xf32> to vector<16x32xf32>
    %311 = arith.mulf %306, %310 : vector<16x32xf32>
    %312 = vector.broadcast %289 : vector<1x32xf32> to vector<16x32xf32>
    %313 = arith.mulf %311, %312 : vector<16x32xf32>
    %314 = vector.broadcast %290 : vector<1x32xf32> to vector<16x32xf32>
    %315 = arith.addf %313, %314 : vector<16x32xf32>
    %c1_64 = arith.constant 1 : index
    %c0_65 = arith.constant 0 : index
    %c0_66 = arith.constant 0 : index
    %316 = vector.load %arg7[%c1_64, %c0_65, %c0_66] : memref<2x32x64xf32, #tpu.memory_space<vmem>>, vector<1x32x64xf32>
    %317 = vector.shape_cast %316 : vector<1x32x64xf32> to vector<32x64xf32>
    %cst_67 = arith.constant dense<0.000000e+00> : vector<16x64xf32>
    %318 = tpu.matmul %315, %317, %cst_67 {dimension_numbers = #tpu.dot_dimension_numbers<[1], [0], [0], [1], [0, 0, 1, 1], [], []>} : vector<16x32xf32>, vector<32x64xf32>, vector<16x64xf32> -> vector<16x64xf32>
    %319 = vector.broadcast %287 : vector<1x64xf32> to vector<16x64xf32>
    %320 = arith.addf %318, %319 : vector<16x64xf32>
    %cst_68 = arith.constant 5.000000e-01 : f32
    %321 = vector.broadcast %cst_68 : f32 to vector<16x64xf32>
    %322 = arith.mulf %321, %320 : vector<16x64xf32>
    %cst_69 = arith.constant 0.707106769 : f32
    %323 = vector.broadcast %cst_69 : f32 to vector<16x64xf32>
    %324 = arith.mulf %320, %323 : vector<16x64xf32>
    %325 = math.erf %324 : vector<16x64xf32>
    %cst_70 = arith.constant 1.000000e+00 : f32
    %326 = vector.broadcast %cst_70 : f32 to vector<16x64xf32>
    %327 = arith.addf %326, %325 : vector<16x64xf32>
    %328 = arith.mulf %322, %327 : vector<16x64xf32>
    %c1_71 = arith.constant 1 : index
    %c0_72 = arith.constant 0 : index
    %c0_73 = arith.constant 0 : index
    %329 = vector.load %arg8[%c1_71, %c0_72, %c0_73] : memref<2x64x32xf32, #tpu.memory_space<vmem>>, vector<1x64x32xf32>
    %330 = vector.shape_cast %329 : vector<1x64x32xf32> to vector<64x32xf32>
    %cst_74 = arith.constant dense<0.000000e+00> : vector<16x32xf32>
    %331 = tpu.matmul %328, %330, %cst_74 {dimension_numbers = #tpu.dot_dimension_numbers<[1], [0], [0], [1], [0, 0, 1, 1], [], []>} : vector<16x64xf32>, vector<64x32xf32>, vector<16x32xf32> -> vector<16x32xf32>
    %332 = vector.broadcast %288 : vector<1x32xf32> to vector<16x32xf32>
    %333 = arith.addf %331, %332 : vector<16x32xf32>
    %334 = arith.addf %315, %333 : vector<16x32xf32>
    %cst_75 = arith.constant dense<0.000000e+00> : vector<16xf32>
    %335 = vector.multi_reduction <add>, %334, %cst_75 [1] : vector<16x32xf32> to vector<16xf32>
    %336 = vector.shape_cast %335 : vector<16xf32> to vector<16x1xf32>
    %cst_76 = arith.constant 3.200000e+01 : f32
    %337 = vector.broadcast %cst_76 : f32 to vector<16x1xf32>
    %338 = arith.divf %336, %337 : vector<16x1xf32>
    %339 = vector.broadcast %338 : vector<16x1xf32> to vector<16x32xf32>
    %340 = arith.subf %334, %339 : vector<16x32xf32>
    %341 = arith.mulf %340, %340 : vector<16x32xf32>
    %cst_77 = arith.constant dense<0.000000e+00> : vector<16xf32>
    %342 = vector.multi_reduction <add>, %341, %cst_77 [1] : vector<16x32xf32> to vector<16xf32>
    %343 = vector.shape_cast %342 : vector<16xf32> to vector<16x1xf32>
    %cst_78 = arith.constant 3.200000e+01 : f32
    %344 = vector.broadcast %cst_78 : f32 to vector<16x1xf32>
    %345 = arith.divf %343, %344 : vector<16x1xf32>
    %346 = vector.broadcast %338 : vector<16x1xf32> to vector<16x32xf32>
    %347 = arith.subf %334, %346 : vector<16x32xf32>
    %cst_79 = arith.constant 9.99999974E-6 : f32
    %348 = vector.broadcast %cst_79 : f32 to vector<16x1xf32>
    %349 = arith.addf %345, %348 : vector<16x1xf32>
    %350 = math.rsqrt %349 : vector<16x1xf32>
    %351 = vector.broadcast %350 : vector<16x1xf32> to vector<16x32xf32>
    %352 = arith.mulf %347, %351 : vector<16x32xf32>
    %353 = vector.broadcast %291 : vector<1x32xf32> to vector<16x32xf32>
    %354 = arith.mulf %352, %353 : vector<16x32xf32>
    %355 = vector.broadcast %292 : vector<1x32xf32> to vector<16x32xf32>
    %356 = arith.addf %354, %355 : vector<16x32xf32>
    %c0_80 = arith.constant 0 : index
    %c0_81 = arith.constant 0 : index
    %357 = vector.load %arg10[%c0_80, %c0_81] : memref<2x32xf32, #tpu.memory_space<vmem>>, vector<2x32xf32>
    %358 = vector.extract_strided_slice %357 {offsets = [0, 0], sizes = [1, 32], strides = [1, 1]} : vector<2x32xf32> to vector<1x32xf32>
    %359 = vector.extract_strided_slice %357 {offsets = [1, 0], sizes = [1, 32], strides = [1, 1]} : vector<2x32xf32> to vector<1x32xf32>
    %cst_82 = arith.constant dense<0.000000e+00> : vector<16xf32>
    %360 = vector.multi_reduction <add>, %356, %cst_82 [1] : vector<16x32xf32> to vector<16xf32>
    %361 = vector.shape_cast %360 : vector<16xf32> to vector<16x1xf32>
    %cst_83 = arith.constant 3.200000e+01 : f32
    %362 = vector.broadcast %cst_83 : f32 to vector<16x1xf32>
    %363 = arith.divf %361, %362 : vector<16x1xf32>
    %364 = vector.broadcast %363 : vector<16x1xf32> to vector<16x32xf32>
    %365 = arith.subf %356, %364 : vector<16x32xf32>
    %366 = arith.mulf %365, %365 : vector<16x32xf32>
    %cst_84 = arith.constant dense<0.000000e+00> : vector<16xf32>
    %367 = vector.multi_reduction <add>, %366, %cst_84 [1] : vector<16x32xf32> to vector<16xf32>
    %368 = vector.shape_cast %367 : vector<16xf32> to vector<16x1xf32>
    %cst_85 = arith.constant 3.200000e+01 : f32
    %369 = vector.broadcast %cst_85 : f32 to vector<16x1xf32>
    %370 = arith.divf %368, %369 : vector<16x1xf32>
    %371 = vector.broadcast %363 : vector<16x1xf32> to vector<16x32xf32>
    %372 = arith.subf %356, %371 : vector<16x32xf32>
    %cst_86 = arith.constant 9.99999974E-6 : f32
    %373 = vector.broadcast %cst_86 : f32 to vector<16x1xf32>
    %374 = arith.addf %370, %373 : vector<16x1xf32>
    %375 = math.rsqrt %374 : vector<16x1xf32>
    %376 = vector.broadcast %375 : vector<16x1xf32> to vector<16x32xf32>
    %377 = arith.mulf %372, %376 : vector<16x32xf32>
    %378 = vector.broadcast %358 : vector<1x32xf32> to vector<16x32xf32>
    %379 = arith.mulf %377, %378 : vector<16x32xf32>
    %380 = vector.broadcast %359 : vector<1x32xf32> to vector<16x32xf32>
    %381 = arith.addf %379, %380 : vector<16x32xf32>
    %c0_87 = arith.constant 0 : index
    %c0_88 = arith.constant 0 : index
    %382 = vector.load %arg4[%c0_87, %c0_88] : memref<32x128xf32, #tpu.memory_space<vmem>>, vector<32x128xf32>
    %cst_89 = arith.constant dense<0.000000e+00> : vector<16x128xf32>
    %383 = tpu.matmul %381, %382, %cst_89 {dimension_numbers = #tpu.dot_dimension_numbers<[1], [0], [0], [1], [0, 0, 1, 1], [], []>} : vector<16x32xf32>, vector<32x128xf32>, vector<16x128xf32> -> vector<16x128xf32>
    %c0_90 = arith.constant 0 : index
    %c0_91 = arith.constant 0 : index
    %384 = vector.load %arg11[%c0_90, %c0_91] : memref<16x128xf32, #tpu.memory_space<vmem>>, vector<16x128xf32>
    tpu.vector_store %arg11[%c0_90, %c0_91], %383 {strides = array<i32>} : memref<16x128xf32, #tpu.memory_space<vmem>>, vector<16x128xf32>,
    return
  }
}

</mosaic_0001>

<llo_original>
// kernel: gpt2_forward.1
$region0: #{gpt2_forward.1}
  #allocation0 [shape = 'u32[]', space=smem, size = 0x4, offset = 0x4, fixed_abs, tag = 'smem constant byte address 0x4 - core index']
  #allocation1 [shape = 'u32[72,128]{1,0:T(1,128)}', space=vmem, size = 0x9000, scoped, tag = 'internal scratch']
  %s0 = inlined_call_operand.vmem [shape: s32[16], index: 0, kind: input, shape index: {}]
  %s1 = inlined_call_operand.vmem [shape: f32[16,32], index: 1, kind: input, shape index: {}]
  %s2 = inlined_call_operand.vmem [shape: f32[16,16], index: 2, kind: input, shape index: {}]
  %s3 = inlined_call_operand.vmem [shape: f32[64,32], index: 3, kind: input, shape index: {}]
  %s4 = inlined_call_operand.vmem [shape: f32[32,128], index: 4, kind: input, shape index: {}]
  %s5 = inlined_call_operand.vmem [shape: f32[2,32,96], index: 5, kind: input, shape index: {}]
  %s6 = inlined_call_operand.vmem [shape: f32[2,32,32], index: 6, kind: input, shape index: {}]
  %s7 = inlined_call_operand.vmem [shape: f32[2,32,64], index: 7, kind: input, shape index: {}]
  %s8 = inlined_call_operand.vmem [shape: f32[2,64,32], index: 8, kind: input, shape index: {}]
  %s9 = inlined_call_operand.vmem [shape: f32[2,8,64], index: 9, kind: input, shape index: {}]
  %s10 = inlined_call_operand.vmem [shape: f32[2,32], index: 10, kind: input, shape index: {}]
  %s11 = inlined_call_operand.vmem [shape: f32[16,128], index: 11, kind: output, shape index: {}]
  %s12 = sld [smem:[#allocation0]]
  $region58: #{gpt2_forward.1} parent=0
    _
  %s14 = ssub.s32 1, %s12
  %s15 = scalar_select 0, %s14, %s12
  $region1: #{gpt2_forward.1} parent=0
    #allocation2 [shape = 'u8[512]{0}', space=smem, size = 0x200, scoped, tag = 'input window, operand 0, single buffered']
    #allocation3 [shape = 's32[1]{0}', space=sflag, size = 0x4, scoped, tag = 'scoped memory for gpt2_forward.1']
    %16 = vsyncpa [#allocation3], 0
    // Predicated region
    $region2: #{gpt2_forward.1} parent=1 // pred_check
      _
    $region3: #{gpt2_forward.1} parent=1 // pred_check_branch
      %18 = sbr.rel (0) target = $region5
    $region4: #{gpt2_forward.1} parent=1 // pred_region
      %20 = vsyncadd [#allocation3], 0
      %s22 = sshll.u32 %s0, 4
      %s23 = int_to_ptr.vmem [resolvable:$true] %s22
      %25 = dma.vmem_to_smem %s23, 16, [#allocation2], [#allocation3]
    $region5: #{gpt2_forward.1} parent=1 // pred_fallthru
      _
    // Predicated region
    $region6: #{gpt2_forward.1} parent=1 // pred_check
      _
    $region7: #{gpt2_forward.1} parent=1 // pred_check_branch
      %27 = sbr.rel (0) target = $region9
    $region8: #{gpt2_forward.1} parent=1 // pred_region
      _
    $region9: #{gpt2_forward.1} parent=1 // pred_fallthru
      _
    // Predicated region
    $region10: #{gpt2_forward.1} parent=1 // pred_check
      _
    $region11: #{gpt2_forward.1} parent=1 // pred_check_branch
      %29 = sbr.rel (0) target = $region13
    $region12: #{gpt2_forward.1} parent=1 // pred_region
      _
    $region13: #{gpt2_forward.1} parent=1 // pred_fallthru
      _
    // Predicated region
    $region14: #{gpt2_forward.1} parent=1 // pred_check
      _
    $region15: #{gpt2_forward.1} parent=1 // pred_check_branch
      %31 = sbr.rel (0) target = $region17
    $region16: #{gpt2_forward.1} parent=1 // pred_region
      _
    $region17: #{gpt2_forward.1} parent=1 // pred_fallthru
      _
    // Predicated region
    $region18: #{gpt2_forward.1} parent=1 // pred_check
      _
    $region19: #{gpt2_forward.1} parent=1 // pred_check_branch
      %33 = sbr.rel (0) target = $region21
    $region20: #{gpt2_forward.1} parent=1 // pred_region
      _
    $region21: #{gpt2_forward.1} parent=1 // pred_fallthru
      _
    // Predicated region
    $region22: #{gpt2_forward.1} parent=1 // pred_check
      _
    $region23: #{gpt2_forward.1} parent=1 // pred_check_branch
      %35 = sbr.rel (0) target = $region25
    $region24: #{gpt2_forward.1} parent=1 // pred_region
      _
    $region25: #{gpt2_forward.1} parent=1 // pred_fallthru
      _
    // Predicated region
    $region26: #{gpt2_forward.1} parent=1 // pred_check
      _
    $region27: #{gpt2_forward.1} parent=1 // pred_check_branch
      %37 = sbr.rel (0) target = $region29
    $region28: #{gpt2_forward.1} parent=1 // pred_region
      _
    $region29: #{gpt2_forward.1} parent=1 // pred_fallthru
      _
    // Predicated region
    $region30: #{gpt2_forward.1} parent=1 // pred_check
      _
    $region31: #{gpt2_forward.1} parent=1 // pred_check_branch
      %39 = sbr.rel (0) target = $region33
    $region32: #{gpt2_forward.1} parent=1 // pred_region
      _
    $region33: #{gpt2_forward.1} parent=1 // pred_fallthru
      _
    // Predicated region
    $region34: #{gpt2_forward.1} parent=1 // pred_check
      _
    $region35: #{gpt2_forward.1} parent=1 // pred_check_branch
      %41 = sbr.rel (0) target = $region37
    $region36: #{gpt2_forward.1} parent=1 // pred_region
      _
    $region37: #{gpt2_forward.1} parent=1 // pred_fallthru
      _
    // Predicated region
    $region38: #{gpt2_forward.1} parent=1 // pred_check
      _
    $region39: #{gpt2_forward.1} parent=1 // pred_check_branch
      %43 = sbr.rel (0) target = $region41
    $region40: #{gpt2_forward.1} parent=1 // pred_region
      _
    $region41: #{gpt2_forward.1} parent=1 // pred_fallthru
      _
    // Predicated region
    $region42: #{gpt2_forward.1} parent=1 // pred_check
      _
    $region43: #{gpt2_forward.1} parent=1 // pred_check_branch
      %45 = sbr.rel (0) target = $region45
    $region44: #{gpt2_forward.1} parent=1 // pred_region
      _
    $region45: #{gpt2_forward.1} parent=1 // pred_fallthru
      _
    // Predicated region
    $region46: #{gpt2_forward.1} parent=1 // pred_check
      _
    $region47: #{gpt2_forward.1} parent=1 // pred_check_branch
      %47 = sbr.rel (0) target = $region49
    $region48: #{gpt2_forward.1} parent=1 // pred_region
      %49 = dma.done [#allocation3], 16
    $region49: #{gpt2_forward.1} parent=1 // pred_fallthru
      _
    %50 = sfence
    %v51 = vlaneseq
    %v52 = vshrl.u32 %v51, 7
    %v53 = vadd.s32 %v52, 8
    %v54 = vlaneseq
    %v55 = vand.u32 %v54, 127
    %vm56 = vcmp.eq.s32.totalorder %v52, 0
    %vm57 = vcmp.eq.s32.totalorder %v53, 0
    %s58 = sld [smem:[#allocation2]]
    %v59 = vstv %s58
    %v60 = vsel %vm56, %v59, 0
    %v61 = vsel %vm57, %v59, 0
    %vm62 = vcmp.eq.s32.totalorder %v52, 1
    %vm63 = vcmp.eq.s32.totalorder %v53, 1
    %s64 = sld [smem:[#allocation2 + $0x1]]
    %v65 = vstv %s64
    %v66 = vsel %vm62, %v65, %v60
    %v67 = vsel %vm63, %v65, %v61
    %vm68 = vcmp.eq.s32.totalorder %v52, 2
    %vm69 = vcmp.eq.s32.totalorder %v53, 2
    %s70 = sld [smem:[#allocation2 + $0x2]]
    %v71 = vstv %s70
    %v72 = vsel %vm68, %v71, %v66
    %v73 = vsel %vm69, %v71, %v67
    %vm74 = vcmp.eq.s32.totalorder %v52, 3
    %vm75 = vcmp.eq.s32.totalorder %v53, 3
    %s76 = sld [smem:[#allocation2 + $0x3]]
    %v77 = vstv %s76
    %v78 = vsel %vm74, %v77, %v72
    %v79 = vsel %vm75, %v77, %v73
    %vm80 = vcmp.eq.s32.totalorder %v52, 4
    %vm81 = vcmp.eq.s32.totalorder %v53, 4
    %s82 = sld [smem:[#allocation2 + $0x4]]
    %v83 = vstv %s82
    %v84 = vsel %vm80, %v83, %v78
    %v85 = vsel %vm81, %v83, %v79
    %vm86 = vcmp.eq.s32.totalorder %v52, 5
    %vm87 = vcmp.eq.s32.totalorder %v53, 5
    %s88 = sld [smem:[#allocation2 + $0x5]]
    %v89 = vstv %s88
    %v90 = vsel %vm86, %v89, %v84
    %v91 = vsel %vm87, %v89, %v85
    %vm92 = vcmp.eq.s32.totalorder %v52, 6
    %vm93 = vcmp.eq.s32.totalorder %v53, 6
    %s94 = sld [smem:[#allocation2 + $0x6]]
    %v95 = vstv %s94
    %v96 = vsel %vm92, %v95, %v90
    %v97 = vsel %vm93, %v95, %v91
    %vm98 = vcmp.eq.s32.totalorder %v52, 7
    %vm99 = vcmp.eq.s32.totalorder %v53, 7
    %s100 = sld [smem:[#allocation2 + $0x7]]
    %v101 = vstv %s100
    %v102 = vsel %vm98, %v101, %v96
    %v103 = vsel %vm99, %v101, %v97
    %vm104 = vcmp.eq.s32.totalorder %v52, 8
    %vm105 = vcmp.eq.s32.totalorder %v53, 8
    %s106 = sld [smem:[#allocation2 + $0x8]]
    %v107 = vstv %s106
    %v108 = vsel %vm104, %v107, %v102
    %v109 = vsel %vm105, %v107, %v103
    %vm110 = vcmp.eq.s32.totalorder %v52, 9
    %vm111 = vcmp.eq.s32.totalorder %v53, 9
    %s112 = sld [smem:[#allocation2 + $0x9]]
    %v113 = vstv %s112
    %v114 = vsel %vm110, %v113, %v108
    %v115 = vsel %vm111, %v113, %v109
    %vm116 = vcmp.eq.s32.totalorder %v52, 10
    %vm117 = vcmp.eq.s32.totalorder %v53, 10
    %s118 = sld [smem:[#allocation2 + $0xa]]
    %v119 = vstv %s118
    %v120 = vsel %vm116, %v119, %v114
    %v121 = vsel %vm117, %v119, %v115
    %vm122 = vcmp.eq.s32.totalorder %v52, 11
    %vm123 = vcmp.eq.s32.totalorder %v53, 11
    %s124 = sld [smem:[#allocation2 + $0xb]]
    %v125 = vstv %s124
    %v126 = vsel %vm122, %v125, %v120
    %v127 = vsel %vm123, %v125, %v121
    %vm128 = vcmp.eq.s32.totalorder %v52, 12
    %vm129 = vcmp.eq.s32.totalorder %v53, 12
    %s130 = sld [smem:[#allocation2 + $0xc]]
    %v131 = vstv %s130
    %v132 = vsel %vm128, %v131, %v126
    %v133 = vsel %vm129, %v131, %v127
    %vm134 = vcmp.eq.s32.totalorder %v52, 13
    %vm135 = vcmp.eq.s32.totalorder %v53, 13
    %s136 = sld [smem:[#allocation2 + $0xd]]
    %v137 = vstv %s136
    %v138 = vsel %vm134, %v137, %v132
    %v139 = vsel %vm135, %v137, %v133
    %vm140 = vcmp.eq.s32.totalorder %v52, 14
    %vm141 = vcmp.eq.s32.totalorder %v53, 14
    %s142 = sld [smem:[#allocation2 + $0xe]]
    %v143 = vstv %s142
    %v144 = vsel %vm140, %v143, %v138
    %v145 = vsel %vm141, %v143, %v139
    %vm146 = vcmp.eq.s32.totalorder %v52, 15
    %vm147 = vcmp.eq.s32.totalorder %v53, 15
    %s148 = sld [smem:[#allocation2 + $0xf]]
    %v149 = vstv %s148
    %v150 = vsel %vm146, %v149, %v144
    %v151 = vsel %vm147, %v149, %v145
    %vm152 = vcmp.eq.s32.totalorder %v150, %v55
    %vm153 = vcmp.eq.s32.totalorder %v151, %v55
    %v154 = vsel %vm152, 1, 0
    %v155 = vsel %vm153, 1, 0
    %v156 = vcvt.s32.f32 %v154
    %v157 = vcvt.s32.f32 %v155
    %v158 = vld [vmem:[%s3] sm:$0xff]
    %v159 = vld [vmem:[%s3 + $0x8] sm:$0xff]
    %v160 = vld [vmem:[%s3 + $0x10] sm:$0xff]
    %v161 = vld [vmem:[%s3 + $0x18] sm:$0xff]
    %v162 = vld [vmem:[%s3 + $0x20] sm:$0xff]
    %v163 = vld [vmem:[%s3 + $0x28] sm:$0xff]
    %v164 = vld [vmem:[%s3 + $0x30] sm:$0xff]
    %v165 = vld [vmem:[%s3 + $0x38] sm:$0xff]
    %vm166 = vcmask 523264
    %v168 = vsel %vm166, %v156, 0
    %v171 = vsel %vm166, %v157, 0
    %173 = vmatpush.msra.mxu0 0.0
    %174 = vmatpush.msra.mxu0 0.0
    %175 = vmatpush.msra.mxu0 0.0
    %176 = vmatpush.msra.mxu0 0.0
    %177 = vmatpush.msra.mxu0 0.0
    %178 = vmatpush.msra.mxu0 0.0
    %179 = vmatpush.msra.mxu0 0.0
    %180 = vmatpush.msra.mxu0 0.0
    %181 = vmatpush.msra.mxu0 %v165
    %182 = vmatpush.msra.mxu0 %v164
    %183 = vmatpush.msra.mxu0 %v163
    %184 = vmatpush.msra.mxu0 %v162
    %185 = vmatpush.msra.mxu0 %v161
    %186 = vmatpush.msra.mxu0 %v160
    %187 = vmatpush.msra.mxu0 %v159
    %188 = vmatpush.msra.mxu0 %v158
    %189 = vmatmul.f32.gmra.mxu0 %v168
    %v190 = vpop.f32.mrf.mxu0
    %v191 = vadd.f32 0.0, %v190
    %192 = vmatmul.f32.gmra.mxu0 %v171
    %v193 = vpop.f32.mrf.mxu0
    %v194 = vadd.f32 0.0, %v193
    %195 = vdwg.mxu0
    %v196 = vmul.f32 %v191, 5.656854
    %v197 = vmul.f32 %v194, 5.656854
    %v198 = vld [vmem:[%s1] sm:$0xff]
    %v199 = vld [vmem:[%s1 + $0x8] sm:$0xff]
    %v200 = vadd.f32 %v196, %v198
    %v201 = vadd.f32 %v197, %v199
    %v202 = vld [vmem:[%s2] sm:$0xff]
    %v203 = vld [vmem:[%s2 + $0x8] sm:$0xff]
    %v204 = vld [vmem:[%s5] sm:$0xff]
    %v205 = vld [vmem:[%s5 + $0x8] sm:$0xff]
    %v206 = vld [vmem:[%s5 + $0x10] sm:$0xff]
    %v207 = vld [vmem:[%s5 + $0x18] sm:$0xff]
    %vm208 = vcmask 261120
    %v210 = vsel %vm208, %v200, 0
    %v213 = vsel %vm208, %v201, 0
    %215 = vmatpush.msra.mxu0 0.0
    %216 = vmatpush.msra.mxu0 0.0
    %217 = vmatpush.msra.mxu0 0.0
    %218 = vmatpush.msra.mxu0 0.0
    %219 = vmatpush.msra.mxu0 0.0
    %220 = vmatpush.msra.mxu0 0.0
    %221 = vmatpush.msra.mxu0 0.0
    %222 = vmatpush.msra.mxu0 0.0
    %223 = vmatpush.msra.mxu0 0.0
    %224 = vmatpush.msra.mxu0 0.0
    %225 = vmatpush.msra.mxu0 0.0
    %226 = vmatpush.msra.mxu0 0.0
    %227 = vmatpush.msra.mxu0 %v207
    %228 = vmatpush.msra.mxu0 %v206
    %229 = vmatpush.msra.mxu0 %v205
    %230 = vmatpush.msra.mxu0 %v204
    %231 = vmatmul.f32.gmra.mxu0 %v210
    %v232 = vpop.f32.mrf.mxu0
    %v233 = vadd.f32 0.0, %v232
    %234 = vmatmul.f32.gmra.mxu0 %v213
    %v235 = vpop.f32.mrf.mxu0
    %v236 = vadd.f32 0.0, %v235
    %237 = vdwg.mxu0
    %240 = vrot.lane.b32.xlu0 %v233, 120
    %v241 = vpop.permute.xlu0 %240
    %242 = vrot.lane.b32.xlu0 %v236, 120
    %v243 = vpop.permute.xlu0 %242
    %244 = vrot.lane.b32.xlu0 %v233, 112
    %v245 = vpop.permute.xlu0 %244
    %246 = vrot.lane.b32.xlu0 %v236, 112
    %v247 = vpop.permute.xlu0 %246
    %248 = vrot.lane.b32.xlu0 %v233, 104
    %v249 = vpop.permute.xlu0 %248
    %250 = vrot.lane.b32.xlu0 %v236, 104
    %v251 = vpop.permute.xlu0 %250
    %252 = vrot.lane.b32.xlu0 %v233, 96
    %v253 = vpop.permute.xlu0 %252
    %254 = vrot.lane.b32.xlu0 %v236, 96
    %v255 = vpop.permute.xlu0 %254
    %vm256 = vcmask 64512
    %v257 = vsel %vm256, %v233, 0
    %v259 = vsel %vm256, %v236, 0
    %v261 = vsel %vm256, %v253, 0
    %v263 = vsel %vm256, %v255, 0
    %265 = vmatpush.xpose.msra.mxu0 0.0
    %266 = vmatpush.xpose.msra.mxu0 0.0
    %267 = vmatpush.xpose.msra.mxu0 0.0
    %268 = vmatpush.xpose.msra.mxu0 0.0
    %269 = vmatpush.xpose.msra.mxu0 0.0
    %270 = vmatpush.xpose.msra.mxu0 0.0
    %271 = vmatpush.xpose.msra.mxu0 0.0
    %272 = vmatpush.xpose.msra.mxu0 0.0
    %273 = vmatpush.xpose.msra.mxu0 0.0
    %274 = vmatpush.xpose.msra.mxu0 0.0
    %275 = vmatpush.xpose.msra.mxu0 0.0
    %276 = vmatpush.xpose.msra.mxu0 0.0
    %277 = vmatpush.xpose.msra.mxu0 0.0
    %278 = vmatpush.xpose.msra.mxu0 0.0
    %279 = vmatpush.xpose.msra.mxu0 %v263
    %280 = vmatpush.xpose.msra.mxu0 %v261
    %281 = vmatmul.f32.gmra.mxu0 %v257
    %v282 = vpop.f32.mrf.mxu0
    %v283 = vadd.f32 %v202, %v282
    %284 = vmatmul.f32.gmra.mxu0 %v259
    %v285 = vpop.f32.mrf.mxu0
    %v286 = vadd.f32 %v203, %v285
    %287 = vdwg.mxu0
    %288 = vrot.lane.b32.xlu0 %v241, 96
    %v289 = vpop.permute.xlu0 %288
    %290 = vrot.lane.b32.xlu0 %v243, 96
    %v291 = vpop.permute.xlu0 %290
    %v292 = vsel %vm256, %v241, 0
    %v294 = vsel %vm256, %v243, 0
    %v296 = vsel %vm256, %v289, 0
    %v298 = vsel %vm256, %v291, 0
    %300 = vmatpush.xpose.msra.mxu0 0.0
    %301 = vmatpush.xpose.msra.mxu0 0.0
    %302 = vmatpush.xpose.msra.mxu0 0.0
    %303 = vmatpush.xpose.msra.mxu0 0.0
    %304 = vmatpush.xpose.msra.mxu0 0.0
    %305 = vmatpush.xpose.msra.mxu0 0.0
    %306 = vmatpush.xpose.msra.mxu0 0.0
    %307 = vmatpush.xpose.msra.mxu0 0.0
    %308 = vmatpush.xpose.msra.mxu0 0.0
    %309 = vmatpush.xpose.msra.mxu0 0.0
    %310 = vmatpush.xpose.msra.mxu0 0.0
    %311 = vmatpush.xpose.msra.mxu0 0.0
    %312 = vmatpush.xpose.msra.mxu0 0.0
    %313 = vmatpush.xpose.msra.mxu0 0.0
    %314 = vmatpush.xpose.msra.mxu0 %v298
    %315 = vmatpush.xpose.msra.mxu0 %v296
    %316 = vmatmul.f32.gmra.mxu0 %v292
    %v317 = vpop.f32.mrf.mxu0
    %v318 = vadd.f32 %v202, %v317
    %319 = vmatmul.f32.gmra.mxu0 %v294
    %v320 = vpop.f32.mrf.mxu0
    %v321 = vadd.f32 %v203, %v320
    %322 = vdwg.mxu0
    %323 = vrot.lane.b32.xlu0 %v245, 96
    %v324 = vpop.permute.xlu0 %323
    %325 = vrot.lane.b32.xlu0 %v247, 96
    %v326 = vpop.permute.xlu0 %325
    %v327 = vsel %vm256, %v245, 0
    %v329 = vsel %vm256, %v247, 0
    %v331 = vsel %vm256, %v324, 0
    %v333 = vsel %vm256, %v326, 0
    %335 = vmatpush.xpose.msra.mxu0 0.0
    %336 = vmatpush.xpose.msra.mxu0 0.0
    %337 = vmatpush.xpose.msra.mxu0 0.0
    %338 = vmatpush.xpose.msra.mxu0 0.0
    %339 = vmatpush.xpose.msra.mxu0 0.0
    %340 = vmatpush.xpose.msra.mxu0 0.0
    %341 = vmatpush.xpose.msra.mxu0 0.0
    %342 = vmatpush.xpose.msra.mxu0 0.0
    %343 = vmatpush.xpose.msra.mxu0 0.0
    %344 = vmatpush.xpose.msra.mxu0 0.0
    %345 = vmatpush.xpose.msra.mxu0 0.0
    %346 = vmatpush.xpose.msra.mxu0 0.0
    %347 = vmatpush.xpose.msra.mxu0 0.0
    %348 = vmatpush.xpose.msra.mxu0 0.0
    %349 = vmatpush.xpose.msra.mxu0 %v333
    %350 = vmatpush.xpose.msra.mxu0 %v331
    %351 = vmatmul.f32.gmra.mxu0 %v327
    %v352 = vpop.f32.mrf.mxu0
    %v353 = vadd.f32 %v202, %v352
    %354 = vmatmul.f32.gmra.mxu0 %v329
    %v355 = vpop.f32.mrf.mxu0
    %v356 = vadd.f32 %v203, %v355
    %357 = vdwg.mxu0
    %358 = vrot.lane.b32.xlu0 %v249, 96
    %v359 = vpop.permute.xlu0 %358
    %360 = vrot.lane.b32.xlu0 %v251, 96
    %v361 = vpop.permute.xlu0 %360
    %v362 = vsel %vm256, %v249, 0
    %v364 = vsel %vm256, %v251, 0
    %v366 = vsel %vm256, %v359, 0
    %v368 = vsel %vm256, %v361, 0
    %370 = vmatpush.xpose.msra.mxu0 0.0
    %371 = vmatpush.xpose.msra.mxu0 0.0
    %372 = vmatpush.xpose.msra.mxu0 0.0
    %373 = vmatpush.xpose.msra.mxu0 0.0
    %374 = vmatpush.xpose.msra.mxu0 0.0
    %375 = vmatpush.xpose.msra.mxu0 0.0
    %376 = vmatpush.xpose.msra.mxu0 0.0
    %377 = vmatpush.xpose.msra.mxu0 0.0
    %378 = vmatpush.xpose.msra.mxu0 0.0
    %379 = vmatpush.xpose.msra.mxu0 0.0
    %380 = vmatpush.xpose.msra.mxu0 0.0
    %381 = vmatpush.xpose.msra.mxu0 0.0
    %382 = vmatpush.xpose.msra.mxu0 0.0
    %383 = vmatpush.xpose.msra.mxu0 0.0
    %384 = vmatpush.xpose.msra.mxu0 %v368
    %385 = vmatpush.xpose.msra.mxu0 %v366
    %386 = vmatmul.f32.gmra.mxu0 %v362
    %v387 = vpop.f32.mrf.mxu0
    %v388 = vadd.f32 %v202, %v387
    %389 = vmatmul.f32.gmra.mxu0 %v364
    %v390 = vpop.f32.mrf.mxu0
    %v391 = vadd.f32 %v203, %v390
    %392 = vdwg.mxu0
    %vm393 = vcmask 130048
    %v394 = vsel %vm393, %v283, -inf
    %395 = vmax.xlane.f32.xlu0 %v394
    %v396 = vpop.xlane.xlu0 %395
    %v397 = vsel %vm393, %v286, -inf
    %398 = vmax.xlane.f32.xlu0 %v397
    %v399 = vpop.xlane.xlu0 %398
    %v400 = vsel %vm393, %v318, -inf
    %401 = vmax.xlane.f32.xlu0 %v400
    %v402 = vpop.xlane.xlu0 %401
    %v403 = vsel %vm393, %v321, -inf
    %404 = vmax.xlane.f32.xlu0 %v403
    %v405 = vpop.xlane.xlu0 %404
    %v406 = vsel %vm393, %v353, -inf
    %407 = vmax.xlane.f32.xlu0 %v406
    %v408 = vpop.xlane.xlu0 %407
    %v409 = vsel %vm393, %v356, -inf
    %410 = vmax.xlane.f32.xlu0 %v409
    %v411 = vpop.xlane.xlu0 %410
    %v412 = vsel %vm393, %v388, -inf
    %413 = vmax.xlane.f32.xlu0 %v412
    %v414 = vpop.xlane.xlu0 %413
    %v415 = vsel %vm393, %v391, -inf
    %416 = vmax.xlane.f32.xlu0 %v415
    %v417 = vpop.xlane.xlu0 %416
    %v418 = vsub.f32 %v283, %v396
    %v419 = vsub.f32 %v286, %v399
    %v420 = vsub.f32 %v318, %v402
    %v421 = vsub.f32 %v321, %v405
    %v422 = vsub.f32 %v353, %v408
    %v423 = vsub.f32 %v356, %v411
    %v424 = vsub.f32 %v388, %v414
    %v425 = vsub.f32 %v391, %v417
    %v426 = vmul.f32 %v418, 1.442695
    %v427 = vpow.pop %v426
    %v428 = vmul.f32 %v419, 1.442695
    %v429 = vpow.pop %v428
    %v430 = vmul.f32 %v420, 1.442695
    %v431 = vpow.pop %v430
    %v432 = vmul.f32 %v421, 1.442695
    %v433 = vpow.pop %v432
    %v434 = vmul.f32 %v422, 1.442695
    %v435 = vpow.pop %v434
    %v436 = vmul.f32 %v423, 1.442695
    %v437 = vpow.pop %v436
    %v438 = vmul.f32 %v424, 1.442695
    %v439 = vpow.pop %v438
    %v440 = vmul.f32 %v425, 1.442695
    %v441 = vpow.pop %v440
    %v442 = vsel %vm393, %v427, 0.0
    %443 = vadd.xlane.f32.xlu0 %v442
    %v444 = vpop.xlane.xlu0 %443
    %v445 = vsel %vm393, %v429, 0.0
    %446 = vadd.xlane.f32.xlu0 %v445
    %v447 = vpop.xlane.xlu0 %446
    %v448 = vsel %vm393, %v431, 0.0
    %449 = vadd.xlane.f32.xlu0 %v448
    %v450 = vpop.xlane.xlu0 %449
    %v451 = vsel %vm393, %v433, 0.0
    %452 = vadd.xlane.f32.xlu0 %v451
    %v453 = vpop.xlane.xlu0 %452
    %v454 = vsel %vm393, %v435, 0.0
    %455 = vadd.xlane.f32.xlu0 %v454
    %v456 = vpop.xlane.xlu0 %455
    %v457 = vsel %vm393, %v437, 0.0
    %458 = vadd.xlane.f32.xlu0 %v457
    %v459 = vpop.xlane.xlu0 %458
    %v460 = vsel %vm393, %v439, 0.0
    %461 = vadd.xlane.f32.xlu0 %v460
    %v462 = vpop.xlane.xlu0 %461
    %v463 = vsel %vm393, %v441, 0.0
    %464 = vadd.xlane.f32.xlu0 %v463
    %v465 = vpop.xlane.xlu0 %464
    %v466 = vrcp.pop %v444
    %v467 = vrcp.pop %v447
    %v468 = vrcp.pop %v450
    %v469 = vrcp.pop %v453
    %v470 = vrcp.pop %v456
    %v471 = vrcp.pop %v459
    %v472 = vrcp.pop %v462
    %v473 = vrcp.pop %v465
    %v474 = vmul.f32 %v427, %v466
    %v475 = vmul.f32 %v429, %v467
    %v476 = vmul.f32 %v431, %v468
    %v477 = vmul.f32 %v433, %v469
    %v478 = vmul.f32 %v435, %v470
    %v479 = vmul.f32 %v437, %v471
    %v480 = vmul.f32 %v439, %v472
    %v481 = vmul.f32 %v441, %v473
    %482 = vrot.lane.b32.xlu0 %v233, 64
    %v483 = vpop.permute.xlu0 %482
    %484 = vrot.lane.b32.xlu0 %v236, 64
    %v485 = vpop.permute.xlu0 %484
    %v489 = vsel %vm393, %v474, 0
    %v492 = vsel %vm393, %v475, 0
    %494 = vmatpush.msra.mxu0 0.0
    %495 = vmatpush.msra.mxu0 0.0
    %496 = vmatpush.msra.mxu0 0.0
    %497 = vmatpush.msra.mxu0 0.0
    %498 = vmatpush.msra.mxu0 0.0
    %499 = vmatpush.msra.mxu0 0.0
    %500 = vmatpush.msra.mxu0 0.0
    %501 = vmatpush.msra.mxu0 0.0
    %502 = vmatpush.msra.mxu0 0.0
    %503 = vmatpush.msra.mxu0 0.0
    %504 = vmatpush.msra.mxu0 0.0
    %505 = vmatpush.msra.mxu0 0.0
    %506 = vmatpush.msra.mxu0 0.0
    %507 = vmatpush.msra.mxu0 0.0
    %508 = vmatpush.msra.mxu0 %v485
    %509 = vmatpush.msra.mxu0 %v483
    %510 = vmatmul.f32.gmra.mxu0 %v489
    %v511 = vpop.f32.mrf.mxu0
    %v512 = vadd.f32 0.0, %v511
    %513 = vmatmul.f32.gmra.mxu0 %v492
    %v514 = vpop.f32.mrf.mxu0
    %v515 = vadd.f32 0.0, %v514
    %516 = vdwg.mxu0
    %517 = vrot.lane.b32.xlu0 %v241, 64
    %v518 = vpop.permute.xlu0 %517
    %519 = vrot.lane.b32.xlu0 %v243, 64
    %v520 = vpop.permute.xlu0 %519
    %v524 = vsel %vm393, %v476, 0
    %v527 = vsel %vm393, %v477, 0
    %529 = vmatpush.msra.mxu0 0.0
    %530 = vmatpush.msra.mxu0 0.0
    %531 = vmatpush.msra.mxu0 0.0
    %532 = vmatpush.msra.mxu0 0.0
    %533 = vmatpush.msra.mxu0 0.0
    %534 = vmatpush.msra.mxu0 0.0
    %535 = vmatpush.msra.mxu0 0.0
    %536 = vmatpush.msra.mxu0 0.0
    %537 = vmatpush.msra.mxu0 0.0
    %538 = vmatpush.msra.mxu0 0.0
    %539 = vmatpush.msra.mxu0 0.0
    %540 = vmatpush.msra.mxu0 0.0
    %541 = vmatpush.msra.mxu0 0.0
    %542 = vmatpush.msra.mxu0 0.0
    %543 = vmatpush.msra.mxu0 %v520
    %544 = vmatpush.msra.mxu0 %v518
    %545 = vmatmul.f32.gmra.mxu0 %v524
    %v546 = vpop.f32.mrf.mxu0
    %v547 = vadd.f32 0.0, %v546
    %548 = vmatmul.f32.gmra.mxu0 %v527
    %v549 = vpop.f32.mrf.mxu0
    %v550 = vadd.f32 0.0, %v549
    %551 = vdwg.mxu0
    %552 = vrot.lane.b32.xlu0 %v245, 64
    %v553 = vpop.permute.xlu0 %552
    %554 = vrot.lane.b32.xlu0 %v247, 64
    %v555 = vpop.permute.xlu0 %554
    %v559 = vsel %vm393, %v478, 0
    %v562 = vsel %vm393, %v479, 0
    %564 = vmatpush.msra.mxu0 0.0
    %565 = vmatpush.msra.mxu0 0.0
    %566 = vmatpush.msra.mxu0 0.0
    %567 = vmatpush.msra.mxu0 0.0
    %568 = vmatpush.msra.mxu0 0.0
    %569 = vmatpush.msra.mxu0 0.0
    %570 = vmatpush.msra.mxu0 0.0
    %571 = vmatpush.msra.mxu0 0.0
    %572 = vmatpush.msra.mxu0 0.0
    %573 = vmatpush.msra.mxu0 0.0
    %574 = vmatpush.msra.mxu0 0.0
    %575 = vmatpush.msra.mxu0 0.0
    %576 = vmatpush.msra.mxu0 0.0
    %577 = vmatpush.msra.mxu0 0.0
    %578 = vmatpush.msra.mxu0 %v555
    %579 = vmatpush.msra.mxu0 %v553
    %580 = vmatmul.f32.gmra.mxu0 %v559
    %v581 = vpop.f32.mrf.mxu0
    %v582 = vadd.f32 0.0, %v581
    %583 = vmatmul.f32.gmra.mxu0 %v562
    %v584 = vpop.f32.mrf.mxu0
    %v585 = vadd.f32 0.0, %v584
    %586 = vdwg.mxu0
    %587 = vrot.lane.b32.xlu0 %v249, 64
    %v588 = vpop.permute.xlu0 %587
    %589 = vrot.lane.b32.xlu0 %v251, 64
    %v590 = vpop.permute.xlu0 %589
    %v594 = vsel %vm393, %v480, 0
    %v597 = vsel %vm393, %v481, 0
    %599 = vmatpush.msra.mxu0 0.0
    %600 = vmatpush.msra.mxu0 0.0
    %601 = vmatpush.msra.mxu0 0.0
    %602 = vmatpush.msra.mxu0 0.0
    %603 = vmatpush.msra.mxu0 0.0
    %604 = vmatpush.msra.mxu0 0.0
    %605 = vmatpush.msra.mxu0 0.0
    %606 = vmatpush.msra.mxu0 0.0
    %607 = vmatpush.msra.mxu0 0.0
    %608 = vmatpush.msra.mxu0 0.0
    %609 = vmatpush.msra.mxu0 0.0
    %610 = vmatpush.msra.mxu0 0.0
    %611 = vmatpush.msra.mxu0 0.0
    %612 = vmatpush.msra.mxu0 0.0
    %613 = vmatpush.msra.mxu0 %v590
    %614 = vmatpush.msra.mxu0 %v588
    %615 = vmatmul.f32.gmra.mxu0 %v594
    %v616 = vpop.f32.mrf.mxu0
    %v617 = vadd.f32 0.0, %v616
    %618 = vmatmul.f32.gmra.mxu0 %v597
    %v619 = vpop.f32.mrf.mxu0
    %v620 = vadd.f32 0.0, %v619
    %621 = vdwg.mxu0
    %624 = vrot.lane.b32.xlu0 %v547, 8
    %v625 = vpop.permute.xlu0 %624
    %626 = vrot.lane.b32.xlu0 %v550, 8
    %v627 = vpop.permute.xlu0 %626
    %632 = vrot.lane.b32.xlu0 %v582, 16
    %v633 = vpop.permute.xlu0 %632
    %634 = vrot.lane.b32.xlu0 %v585, 16
    %v635 = vpop.permute.xlu0 %634
    %640 = vrot.lane.b32.xlu0 %v617, 24
    %v641 = vpop.permute.xlu0 %640
    %642 = vrot.lane.b32.xlu0 %v620, 24
    %v643 = vpop.permute.xlu0 %642
    %v646 = vsel %vm256, %v512, %v625
    %v647 = vsel %vm256, %v515, %v627
    %v648 = vsel %vm393, %v646, %v633
    %v649 = vsel %vm393, %v647, %v635
    %vm650 = vcmask 195584
    %v651 = vsel %vm650, %v648, %v641
    %v652 = vsel %vm650, %v649, %v643
    %v653 = vld [vmem:[%s6] sm:$0xff]
    %v654 = vld [vmem:[%s6 + $0x8] sm:$0xff]
    %v655 = vld [vmem:[%s6 + $0x10] sm:$0xff]
    %v656 = vld [vmem:[%s6 + $0x18] sm:$0xff]
    %v658 = vsel %vm208, %v651, 0
    %v661 = vsel %vm208, %v652, 0
    %663 = vmatpush.msra.mxu0 0.0
    %664 = vmatpush.msra.mxu0 0.0
    %665 = vmatpush.msra.mxu0 0.0
    %666 = vmatpush.msra.mxu0 0.0
    %667 = vmatpush.msra.mxu0 0.0
    %668 = vmatpush.msra.mxu0 0.0
    %669 = vmatpush.msra.mxu0 0.0
    %670 = vmatpush.msra.mxu0 0.0
    %671 = vmatpush.msra.mxu0 0.0
    %672 = vmatpush.msra.mxu0 0.0
    %673 = vmatpush.msra.mxu0 0.0
    %674 = vmatpush.msra.mxu0 0.0
    %675 = vmatpush.msra.mxu0 %v656
    %676 = vmatpush.msra.mxu0 %v655
    %677 = vmatpush.msra.mxu0 %v654
    %678 = vmatpush.msra.mxu0 %v653
    %679 = vmatmul.f32.gmra.mxu0 %v658
    %v680 = vpop.f32.mrf.mxu0
    %v681 = vadd.f32 0.0, %v680
    %682 = vmatmul.f32.gmra.mxu0 %v661
    %v683 = vpop.f32.mrf.mxu0
    %v684 = vadd.f32 0.0, %v683
    %685 = vdwg.mxu0
    %v686 = vld [vmem:[%s9] sm:$0xff]
    %v687 = vadd.f32 %v200, %v681
    %v688 = vadd.f32 %v201, %v684
    %v689 = vsel %vm208, %v687, 0.0
    %690 = vadd.xlane.f32.xlu0 %v689
    %v691 = vpop.xlane.xlu0 %690
    %v692 = vsel %vm208, %v688, 0.0
    %693 = vadd.xlane.f32.xlu0 %v692
    %v694 = vpop.xlane.xlu0 %693
    %v695 = vrcp.pop 32.0
    %v696 = vmul.f32 32.0, %v695
    %v697 = vsub.f32 1.0, %v696
    %v698 = vmul.f32 %v695, %v697
    %v699 = vadd.f32 %v695, %v698
    %vm700 = vweird.f32 %v695
    %v701 = vsel %vm700, %v695, %v699
    %v702 = vmul.f32 %v691, %v701
    %v703 = vmul.f32 %v694, %v701
    %v704 = vsub.f32 %v687, %v702
    %v705 = vsub.f32 %v688, %v703
    %v706 = vmul.f32 %v704, %v704
    %v707 = vmul.f32 %v705, %v705
    %v708 = vsel %vm208, %v706, 0.0
    %709 = vadd.xlane.f32.xlu0 %v708
    %v710 = vpop.xlane.xlu0 %709
    %v711 = vsel %vm208, %v707, 0.0
    %712 = vadd.xlane.f32.xlu0 %v711
    %v713 = vpop.xlane.xlu0 %712
    %v714 = vmul.f32 %v710, %v701
    %v715 = vmul.f32 %v713, %v701
    %v716 = vadd.f32 %v714, 1e-05
    %v717 = vadd.f32 %v715, 1e-05
    %v718 = vrsqrt.pop %v716
    %v719 = vmul.f32 %v718, %v716
    %v720 = vmul.f32 %v719, %v718
    %v721 = vmul.f32 0.5, %v720
    %v722 = vsub.f32 1.5, %v721
    %v723 = vmul.f32 %v718, %v722
    %vm724 = vweird.f32 %v716
    %vm725 = vweird.f32 %v718
    %vm726 = vmor %vm724, %vm725
    %v727 = vsel %vm726, %v718, %v723
    %v728 = vrsqrt.pop %v717
    %v729 = vmul.f32 %v728, %v717
    %v730 = vmul.f32 %v729, %v728
    %v731 = vmul.f32 0.5, %v730
    %v732 = vsub.f32 1.5, %v731
    %v733 = vmul.f32 %v728, %v732
    %vm734 = vweird.f32 %v717
    %vm735 = vweird.f32 %v728
    %vm736 = vmor %vm734, %vm735
    %v737 = vsel %vm736, %v728, %v733
    %v738 = vmul.f32 %v704, %v727
    %v739 = vmul.f32 %v705, %v737
    %v740 = vperm.slane %v686, 2
    %v741 = vmul.f32 %v738, %v740
    %v742 = vmul.f32 %v739, %v740
    %v743 = vperm.slane %v686, 3
    %v744 = vadd.f32 %v741, %v743
    %v745 = vadd.f32 %v742, %v743
    %v746 = vld [vmem:[%s7] sm:$0xff]
    %v747 = vld [vmem:[%s7 + $0x8] sm:$0xff]
    %v748 = vld [vmem:[%s7 + $0x10] sm:$0xff]
    %v749 = vld [vmem:[%s7 + $0x18] sm:$0xff]
    %v750 = vperm.slane %v686, 0
    %v752 = vsel %vm208, %v744, 0
    %v755 = vsel %vm208, %v745, 0
    %757 = vmatpush.msra.mxu0 0.0
    %758 = vmatpush.msra.mxu0 0.0
    %759 = vmatpush.msra.mxu0 0.0
    %760 = vmatpush.msra.mxu0 0.0
    %761 = vmatpush.msra.mxu0 0.0
    %762 = vmatpush.msra.mxu0 0.0
    %763 = vmatpush.msra.mxu0 0.0
    %764 = vmatpush.msra.mxu0 0.0
    %765 = vmatpush.msra.mxu0 0.0
    %766 = vmatpush.msra.mxu0 0.0
    %767 = vmatpush.msra.mxu0 0.0
    %768 = vmatpush.msra.mxu0 0.0
    %769 = vmatpush.msra.mxu0 %v749
    %770 = vmatpush.msra.mxu0 %v748
    %771 = vmatpush.msra.mxu0 %v747
    %772 = vmatpush.msra.mxu0 %v746
    %773 = vmatmul.f32.gmra.mxu0 %v752
    %v774 = vpop.f32.mrf.mxu0
    %v775 = vadd.f32 %v750, %v774
    %776 = vmatmul.f32.gmra.mxu0 %v755
    %v777 = vpop.f32.mrf.mxu0
    %v778 = vadd.f32 %v750, %v777
    %779 = vdwg.mxu0
    %v780 = vmul.f32 %v775, 0.5
    %v781 = vmul.f32 %v778, 0.5
    %v782 = vmul.f32 %v775, 0.70710677
    %v783 = vmul.f32 %v778, 0.70710677
    %v784 = vmul.f32 %v782, %v782
    %v785 = vmin.f32 16.0, %v784
    %v786 = vmul.f32 %v785, 2.1237322e-06
    %v787 = vadd.f32 %v786, 0.00028619796
    %v788 = vmul.f32 %v785, %v787
    %v789 = vadd.f32 %v788, 0.0036580483
    %v790 = vmul.f32 %v785, %v789
    %v791 = vadd.f32 %v790, 0.05243302
    %v792 = vmul.f32 %v785, %v791
    %v793 = vadd.f32 %v792, 0.18741608
    %v794 = vmul.f32 %v785, %v793
    %v795 = vadd.f32 %v794, 1.1283791
    %v796 = vmul.f32 %v782, %v795
    %v797 = vmul.f32 %v785, 3.8918573e-05
    %v798 = vadd.f32 %v797, 0.001143296
    %v799 = vmul.f32 %v785, %v798
    %v800 = vadd.f32 %v799, 0.014752088
    %v801 = vmul.f32 %v785, %v800
    %v802 = vadd.f32 %v801, 0.112945676
    %v803 = vmul.f32 %v785, %v802
    %v804 = vadd.f32 %v803, 0.4994258
    %v805 = vmul.f32 %v785, %v804
    %v806 = vadd.f32 %v805, 1.0
    %v807 = vrcp.pop %v806
    %v808 = vmul.f32 %v806, %v807
    %v809 = vsub.f32 1.0, %v808
    %v810 = vmul.f32 %v807, %v809
    %v811 = vadd.f32 %v807, %v810
    %vm812 = vweird.f32 %v806
    %vm813 = vweird.f32 %v807
    %vm814 = vmor %vm812, %vm813
    %v815 = vsel %vm814, %v807, %v811
    %v816 = vand.u32 2147483647, %v806
    %vm817 = vcmp.eq.f32.partialorder %v816, 8.507059e+37
    %v818 = vand.u32 %v806, 2147483648
    %v819 = vor.u32 1.1754944e-38, %v818
    %v820 = vsel %vm817, %v819, %v815
    %v821 = vmul.f32 %v796, %v820
    %v822 = vmin.f32 %v821, 1.0
    %v823 = vmax.f32 %v822, -1.0
    %v824 = vmul.f32 %v783, %v783
    %v825 = vmin.f32 16.0, %v824
    %v826 = vmul.f32 %v825, 2.1237322e-06
    %v827 = vadd.f32 %v826, 0.00028619796
    %v828 = vmul.f32 %v825, %v827
    %v829 = vadd.f32 %v828, 0.0036580483
    %v830 = vmul.f32 %v825, %v829
    %v831 = vadd.f32 %v830, 0.05243302
    %v832 = vmul.f32 %v825, %v831
    %v833 = vadd.f32 %v832, 0.18741608
    %v834 = vmul.f32 %v825, %v833
    %v835 = vadd.f32 %v834, 1.1283791
    %v836 = vmul.f32 %v783, %v835
    %v837 = vmul.f32 %v825, 3.8918573e-05
    %v838 = vadd.f32 %v837, 0.001143296
    %v839 = vmul.f32 %v825, %v838
    %v840 = vadd.f32 %v839, 0.014752088
    %v841 = vmul.f32 %v825, %v840
    %v842 = vadd.f32 %v841, 0.112945676
    %v843 = vmul.f32 %v825, %v842
    %v844 = vadd.f32 %v843, 0.4994258
    %v845 = vmul.f32 %v825, %v844
    %v846 = vadd.f32 %v845, 1.0
    %v847 = vrcp.pop %v846
    %v848 = vmul.f32 %v846, %v847
    %v849 = vsub.f32 1.0, %v848
    %v850 = vmul.f32 %v847, %v849
    %v851 = vadd.f32 %v847, %v850
    %vm852 = vweird.f32 %v846
    %vm853 = vweird.f32 %v847
    %vm854 = vmor %vm852, %vm853
    %v855 = vsel %vm854, %v847, %v851
    %v856 = vand.u32 2147483647, %v846
    %vm857 = vcmp.eq.f32.partialorder %v856, 8.507059e+37
    %v858 = vand.u32 %v846, 2147483648
    %v859 = vor.u32 1.1754944e-38, %v858
    %v860 = vsel %vm857, %v859, %v855
    %v861 = vmul.f32 %v836, %v860
    %v862 = vmin.f32 %v861, 1.0
    %v863 = vmax.f32 %v862, -1.0
    %v864 = vadd.f32 %v823, 1.0
    %v865 = vadd.f32 %v863, 1.0
    %v866 = vmul.f32 %v780, %v864
    %v867 = vmul.f32 %v781, %v865
    %v868 = vld [vmem:[%s8] sm:$0xff]
    %v869 = vld [vmem:[%s8 + $0x8] sm:$0xff]
    %v870 = vld [vmem:[%s8 + $0x10] sm:$0xff]
    %v871 = vld [vmem:[%s8 + $0x18] sm:$0xff]
    %v872 = vld [vmem:[%s8 + $0x20] sm:$0xff]
    %v873 = vld [vmem:[%s8 + $0x28] sm:$0xff]
    %v874 = vld [vmem:[%s8 + $0x30] sm:$0xff]
    %v875 = vld [vmem:[%s8 + $0x38] sm:$0xff]
    %v876 = vperm.slane %v686, 1
    %v878 = vsel %vm166, %v866, 0
    %v881 = vsel %vm166, %v867, 0
    %883 = vmatpush.msra.mxu0 0.0
    %884 = vmatpush.msra.mxu0 0.0
    %885 = vmatpush.msra.mxu0 0.0
    %886 = vmatpush.msra.mxu0 0.0
    %887 = vmatpush.msra.mxu0 0.0
    %888 = vmatpush.msra.mxu0 0.0
    %889 = vmatpush.msra.mxu0 0.0
    %890 = vmatpush.msra.mxu0 0.0
    %891 = vmatpush.msra.mxu0 %v875
    %892 = vmatpush.msra.mxu0 %v874
    %893 = vmatpush.msra.mxu0 %v873
    %894 = vmatpush.msra.mxu0 %v872
    %895 = vmatpush.msra.mxu0 %v871
    %896 = vmatpush.msra.mxu0 %v870
    %897 = vmatpush.msra.mxu0 %v869
    %898 = vmatpush.msra.mxu0 %v868
    %899 = vmatmul.f32.gmra.mxu0 %v878
    %v900 = vpop.f32.mrf.mxu0
    %v901 = vadd.f32 %v876, %v900
    %902 = vmatmul.f32.gmra.mxu0 %v881
    %v903 = vpop.f32.mrf.mxu0
    %v904 = vadd.f32 %v876, %v903
    %905 = vdwg.mxu0
    %v906 = vadd.f32 %v744, %v901
    %v907 = vadd.f32 %v745, %v904
    %v908 = vsel %vm208, %v906, 0.0
    %909 = vadd.xlane.f32.xlu0 %v908
    %v910 = vpop.xlane.xlu0 %909
    %v911 = vsel %vm208, %v907, 0.0
    %912 = vadd.xlane.f32.xlu0 %v911
    %v913 = vpop.xlane.xlu0 %912
    %v914 = vmul.f32 %v910, %v701
    %v915 = vmul.f32 %v913, %v701
    %v916 = vsub.f32 %v906, %v914
    %v917 = vsub.f32 %v907, %v915
    %v918 = vmul.f32 %v916, %v916
    %v919 = vmul.f32 %v917, %v917
    %v920 = vsel %vm208, %v918, 0.0
    %921 = vadd.xlane.f32.xlu0 %v920
    %v922 = vpop.xlane.xlu0 %921
    %v923 = vsel %vm208, %v919, 0.0
    %924 = vadd.xlane.f32.xlu0 %v923
    %v925 = vpop.xlane.xlu0 %924
    %v926 = vmul.f32 %v922, %v701
    %v927 = vmul.f32 %v925, %v701
    %v928 = vadd.f32 %v926, 1e-05
    %v929 = vadd.f32 %v927, 1e-05
    %v930 = vrsqrt.pop %v928
    %v931 = vmul.f32 %v930, %v928
    %v932 = vmul.f32 %v931, %v930
    %v933 = vmul.f32 0.5, %v932
    %v934 = vsub.f32 1.5, %v933
    %v935 = vmul.f32 %v930, %v934
    %vm936 = vweird.f32 %v928
    %vm937 = vweird.f32 %v930
    %vm938 = vmor %vm936, %vm937
    %v939 = vsel %vm938, %v930, %v935
    %v940 = vrsqrt.pop %v929
    %v941 = vmul.f32 %v940, %v929
    %v942 = vmul.f32 %v941, %v940
    %v943 = vmul.f32 0.5, %v942
    %v944 = vsub.f32 1.5, %v943
    %v945 = vmul.f32 %v940, %v944
    %vm946 = vweird.f32 %v929
    %vm947 = vweird.f32 %v940
    %vm948 = vmor %vm946, %vm947
    %v949 = vsel %vm948, %v940, %v945
    %v950 = vmul.f32 %v916, %v939
    %v951 = vmul.f32 %v917, %v949
    %v952 = vperm.slane %v686, 4
    %v953 = vmul.f32 %v950, %v952
    %v954 = vmul.f32 %v951, %v952
    %v955 = vperm.slane %v686, 5
    %v956 = vadd.f32 %v953, %v955
    %v957 = vadd.f32 %v954, %v955
    %s958 = scalar_lea.vmem %s5, 32
    %v959 = vld [vmem:[%s958] sm:$0xff]
    %v960 = vld [vmem:[%s958 + $0x8] sm:$0xff]
    %v961 = vld [vmem:[%s958 + $0x10] sm:$0xff]
    %v962 = vld [vmem:[%s958 + $0x18] sm:$0xff]
    %v964 = vsel %vm208, %v956, 0
    %v967 = vsel %vm208, %v957, 0
    %969 = vmatpush.msra.mxu0 0.0
    %970 = vmatpush.msra.mxu0 0.0
    %971 = vmatpush.msra.mxu0 0.0
    %972 = vmatpush.msra.mxu0 0.0
    %973 = vmatpush.msra.mxu0 0.0
    %974 = vmatpush.msra.mxu0 0.0
    %975 = vmatpush.msra.mxu0 0.0
    %976 = vmatpush.msra.mxu0 0.0
    %977 = vmatpush.msra.mxu0 0.0
    %978 = vmatpush.msra.mxu0 0.0
    %979 = vmatpush.msra.mxu0 0.0
    %980 = vmatpush.msra.mxu0 0.0
    %981 = vmatpush.msra.mxu0 %v962
    %982 = vmatpush.msra.mxu0 %v961
    %983 = vmatpush.msra.mxu0 %v960
    %984 = vmatpush.msra.mxu0 %v959
    %985 = vmatmul.f32.gmra.mxu0 %v964
    %v986 = vpop.f32.mrf.mxu0
    %v987 = vadd.f32 0.0, %v986
    %988 = vmatmul.f32.gmra.mxu0 %v967
    %v989 = vpop.f32.mrf.mxu0
    %v990 = vadd.f32 0.0, %v989
    %991 = vdwg.mxu0
    %994 = vrot.lane.b32.xlu0 %v987, 120
    %v995 = vpop.permute.xlu0 %994
    %996 = vrot.lane.b32.xlu0 %v990, 120
    %v997 = vpop.permute.xlu0 %996
    %998 = vrot.lane.b32.xlu0 %v987, 112
    %v999 = vpop.permute.xlu0 %998
    %1000 = vrot.lane.b32.xlu0 %v990, 112
    %v1001 = vpop.permute.xlu0 %1000
    %1002 = vrot.lane.b32.xlu0 %v987, 104
    %v1003 = vpop.permute.xlu0 %1002
    %1004 = vrot.lane.b32.xlu0 %v990, 104
    %v1005 = vpop.permute.xlu0 %1004
    %1006 = vrot.lane.b32.xlu0 %v987, 96
    %v1007 = vpop.permute.xlu0 %1006
    %1008 = vrot.lane.b32.xlu0 %v990, 96
    %v1009 = vpop.permute.xlu0 %1008
    %v1010 = vsel %vm256, %v987, 0
    %v1012 = vsel %vm256, %v990, 0
    %v1014 = vsel %vm256, %v1007, 0
    %v1016 = vsel %vm256, %v1009, 0
    %1018 = vmatpush.xpose.msra.mxu0 0.0
    %1019 = vmatpush.xpose.msra.mxu0 0.0
    %1020 = vmatpush.xpose.msra.mxu0 0.0
    %1021 = vmatpush.xpose.msra.mxu0 0.0
    %1022 = vmatpush.xpose.msra.mxu0 0.0
    %1023 = vmatpush.xpose.msra.mxu0 0.0
    %1024 = vmatpush.xpose.msra.mxu0 0.0
    %1025 = vmatpush.xpose.msra.mxu0 0.0
    %1026 = vmatpush.xpose.msra.mxu0 0.0
    %1027 = vmatpush.xpose.msra.mxu0 0.0
    %1028 = vmatpush.xpose.msra.mxu0 0.0
    %1029 = vmatpush.xpose.msra.mxu0 0.0
    %1030 = vmatpush.xpose.msra.mxu0 0.0
    %1031 = vmatpush.xpose.msra.mxu0 0.0
    %1032 = vmatpush.xpose.msra.mxu0 %v1016
    %1033 = vmatpush.xpose.msra.mxu0 %v1014
    %1034 = vmatmul.f32.gmra.mxu0 %v1010
    %v1035 = vpop.f32.mrf.mxu0
    %v1036 = vadd.f32 %v202, %v1035
    %1037 = vmatmul.f32.gmra.mxu0 %v1012
    %v1038 = vpop.f32.mrf.mxu0
    %v1039 = vadd.f32 %v203, %v1038
    %1040 = vdwg.mxu0
    %1041 = vrot.lane.b32.xlu0 %v995, 96
    %v1042 = vpop.permute.xlu0 %1041
    %1043 = vrot.lane.b32.xlu0 %v997, 96
    %v1044 = vpop.permute.xlu0 %1043
    %v1045 = vsel %vm256, %v995, 0
    %v1047 = vsel %vm256, %v997, 0
    %v1049 = vsel %vm256, %v1042, 0
    %v1051 = vsel %vm256, %v1044, 0
    %1053 = vmatpush.xpose.msra.mxu0 0.0
    %1054 = vmatpush.xpose.msra.mxu0 0.0
    %1055 = vmatpush.xpose.msra.mxu0 0.0
    %1056 = vmatpush.xpose.msra.mxu0 0.0
    %1057 = vmatpush.xpose.msra.mxu0 0.0
    %1058 = vmatpush.xpose.msra.mxu0 0.0
    %1059 = vmatpush.xpose.msra.mxu0 0.0
    %1060 = vmatpush.xpose.msra.mxu0 0.0
    %1061 = vmatpush.xpose.msra.mxu0 0.0
    %1062 = vmatpush.xpose.msra.mxu0 0.0
    %1063 = vmatpush.xpose.msra.mxu0 0.0
    %1064 = vmatpush.xpose.msra.mxu0 0.0
    %1065 = vmatpush.xpose.msra.mxu0 0.0
    %1066 = vmatpush.xpose.msra.mxu0 0.0
    %1067 = vmatpush.xpose.msra.mxu0 %v1051
    %1068 = vmatpush.xpose.msra.mxu0 %v1049
    %1069 = vmatmul.f32.gmra.mxu0 %v1045
    %v1070 = vpop.f32.mrf.mxu0
    %v1071 = vadd.f32 %v202, %v1070
    %1072 = vmatmul.f32.gmra.mxu0 %v1047
    %v1073 = vpop.f32.mrf.mxu0
    %v1074 = vadd.f32 %v203, %v1073
    %1075 = vdwg.mxu0
    %1076 = vrot.lane.b32.xlu0 %v999, 96
    %v1077 = vpop.permute.xlu0 %1076
    %1078 = vrot.lane.b32.xlu0 %v1001, 96
    %v1079 = vpop.permute.xlu0 %1078
    %v1080 = vsel %vm256, %v999, 0
    %v1082 = vsel %vm256, %v1001, 0
    %v1084 = vsel %vm256, %v1077, 0
    %v1086 = vsel %vm256, %v1079, 0
    %1088 = vmatpush.xpose.msra.mxu0 0.0
    %1089 = vmatpush.xpose.msra.mxu0 0.0
    %1090 = vmatpush.xpose.msra.mxu0 0.0
    %1091 = vmatpush.xpose.msra.mxu0 0.0
    %1092 = vmatpush.xpose.msra.mxu0 0.0
    %1093 = vmatpush.xpose.msra.mxu0 0.0
    %1094 = vmatpush.xpose.msra.mxu0 0.0
    %1095 = vmatpush.xpose.msra.mxu0 0.0
    %1096 = vmatpush.xpose.msra.mxu0 0.0
    %1097 = vmatpush.xpose.msra.mxu0 0.0
    %1098 = vmatpush.xpose.msra.mxu0 0.0
    %1099 = vmatpush.xpose.msra.mxu0 0.0
    %1100 = vmatpush.xpose.msra.mxu0 0.0
    %1101 = vmatpush.xpose.msra.mxu0 0.0
    %1102 = vmatpush.xpose.msra.mxu0 %v1086
    %1103 = vmatpush.xpose.msra.mxu0 %v1084
    %1104 = vmatmul.f32.gmra.mxu0 %v1080
    %v1105 = vpop.f32.mrf.mxu0
    %v1106 = vadd.f32 %v202, %v1105
    %1107 = vmatmul.f32.gmra.mxu0 %v1082
    %v1108 = vpop.f32.mrf.mxu0
    %v1109 = vadd.f32 %v203, %v1108
    %1110 = vdwg.mxu0
    %1111 = vrot.lane.b32.xlu0 %v1003, 96
    %v1112 = vpop.permute.xlu0 %1111
    %1113 = vrot.lane.b32.xlu0 %v1005, 96
    %v1114 = vpop.permute.xlu0 %1113
    %v1115 = vsel %vm256, %v1003, 0
    %v1117 = vsel %vm256, %v1005, 0
    %v1119 = vsel %vm256, %v1112, 0
    %v1121 = vsel %vm256, %v1114, 0
    %1123 = vmatpush.xpose.msra.mxu0 0.0
    %1124 = vmatpush.xpose.msra.mxu0 0.0
    %1125 = vmatpush.xpose.msra.mxu0 0.0
    %1126 = vmatpush.xpose.msra.mxu0 0.0
    %1127 = vmatpush.xpose.msra.mxu0 0.0
    %1128 = vmatpush.xpose.msra.mxu0 0.0
    %1129 = vmatpush.xpose.msra.mxu0 0.0
    %1130 = vmatpush.xpose.msra.mxu0 0.0
    %1131 = vmatpush.xpose.msra.mxu0 0.0
    %1132 = vmatpush.xpose.msra.mxu0 0.0
    %1133 = vmatpush.xpose.msra.mxu0 0.0
    %1134 = vmatpush.xpose.msra.mxu0 0.0
    %1135 = vmatpush.xpose.msra.mxu0 0.0
    %1136 = vmatpush.xpose.msra.mxu0 0.0
    %1137 = vmatpush.xpose.msra.mxu0 %v1121
    %1138 = vmatpush.xpose.msra.mxu0 %v1119
    %1139 = vmatmul.f32.gmra.mxu0 %v1115
    %v1140 = vpop.f32.mrf.mxu0
    %v1141 = vadd.f32 %v202, %v1140
    %1142 = vmatmul.f32.gmra.mxu0 %v1117
    %v1143 = vpop.f32.mrf.mxu0
    %v1144 = vadd.f32 %v203, %v1143
    %1145 = vdwg.mxu0
    %v1146 = vsel %vm393, %v1036, -inf
    %1147 = vmax.xlane.f32.xlu0 %v1146
    %v1148 = vpop.xlane.xlu0 %1147
    %v1149 = vsel %vm393, %v1039, -inf
    %1150 = vmax.xlane.f32.xlu0 %v1149
    %v1151 = vpop.xlane.xlu0 %1150
    %v1152 = vsel %vm393, %v1071, -inf
    %1153 = vmax.xlane.f32.xlu0 %v1152
    %v1154 = vpop.xlane.xlu0 %1153
    %v1155 = vsel %vm393, %v1074, -inf
    %1156 = vmax.xlane.f32.xlu0 %v1155
    %v1157 = vpop.xlane.xlu0 %1156
    %v1158 = vsel %vm393, %v1106, -inf
    %1159 = vmax.xlane.f32.xlu0 %v1158
    %v1160 = vpop.xlane.xlu0 %1159
    %v1161 = vsel %vm393, %v1109, -inf
    %1162 = vmax.xlane.f32.xlu0 %v1161
    %v1163 = vpop.xlane.xlu0 %1162
    %v1164 = vsel %vm393, %v1141, -inf
    %1165 = vmax.xlane.f32.xlu0 %v1164
    %v1166 = vpop.xlane.xlu0 %1165
    %v1167 = vsel %vm393, %v1144, -inf
    %1168 = vmax.xlane.f32.xlu0 %v1167
    %v1169 = vpop.xlane.xlu0 %1168
    %v1170 = vsub.f32 %v1036, %v1148
    %v1171 = vsub.f32 %v1039, %v1151
    %v1172 = vsub.f32 %v1071, %v1154
    %v1173 = vsub.f32 %v1074, %v1157
    %v1174 = vsub.f32 %v1106, %v1160
    %v1175 = vsub.f32 %v1109, %v1163
    %v1176 = vsub.f32 %v1141, %v1166
    %v1177 = vsub.f32 %v1144, %v1169
    %v1178 = vmul.f32 %v1170, 1.442695
    %v1179 = vpow.pop %v1178
    %v1180 = vmul.f32 %v1171, 1.442695
    %v1181 = vpow.pop %v1180
    %v1182 = vmul.f32 %v1172, 1.442695
    %v1183 = vpow.pop %v1182
    %v1184 = vmul.f32 %v1173, 1.442695
    %v1185 = vpow.pop %v1184
    %v1186 = vmul.f32 %v1174, 1.442695
    %v1187 = vpow.pop %v1186
    %v1188 = vmul.f32 %v1175, 1.442695
    %v1189 = vpow.pop %v1188
    %v1190 = vmul.f32 %v1176, 1.442695
    %v1191 = vpow.pop %v1190
    %v1192 = vmul.f32 %v1177, 1.442695
    %v1193 = vpow.pop %v1192
    %v1194 = vsel %vm393, %v1179, 0.0
    %1195 = vadd.xlane.f32.xlu0 %v1194
    %v1196 = vpop.xlane.xlu0 %1195
    %v1197 = vsel %vm393, %v1181, 0.0
    %1198 = vadd.xlane.f32.xlu0 %v1197
    %v1199 = vpop.xlane.xlu0 %1198
    %v1200 = vsel %vm393, %v1183, 0.0
    %1201 = vadd.xlane.f32.xlu0 %v1200
    %v1202 = vpop.xlane.xlu0 %1201
    %v1203 = vsel %vm393, %v1185, 0.0
    %1204 = vadd.xlane.f32.xlu0 %v1203
    %v1205 = vpop.xlane.xlu0 %1204
    %v1206 = vsel %vm393, %v1187, 0.0
    %1207 = vadd.xlane.f32.xlu0 %v1206
    %v1208 = vpop.xlane.xlu0 %1207
    %v1209 = vsel %vm393, %v1189, 0.0
    %1210 = vadd.xlane.f32.xlu0 %v1209
    %v1211 = vpop.xlane.xlu0 %1210
    %v1212 = vsel %vm393, %v1191, 0.0
    %1213 = vadd.xlane.f32.xlu0 %v1212
    %v1214 = vpop.xlane.xlu0 %1213
    %v1215 = vsel %vm393, %v1193, 0.0
    %1216 = vadd.xlane.f32.xlu0 %v1215
    %v1217 = vpop.xlane.xlu0 %1216
    %v1218 = vrcp.pop %v1196
    %v1219 = vrcp.pop %v1199
    %v1220 = vrcp.pop %v1202
    %v1221 = vrcp.pop %v1205
    %v1222 = vrcp.pop %v1208
    %v1223 = vrcp.pop %v1211
    %v1224 = vrcp.pop %v1214
    %v1225 = vrcp.pop %v1217
    %v1226 = vmul.f32 %v1179, %v1218
    %v1227 = vmul.f32 %v1181, %v1219
    %v1228 = vmul.f32 %v1183, %v1220
    %v1229 = vmul.f32 %v1185, %v1221
    %v1230 = vmul.f32 %v1187, %v1222
    %v1231 = vmul.f32 %v1189, %v1223
    %v1232 = vmul.f32 %v1191, %v1224
    %v1233 = vmul.f32 %v1193, %v1225
    %1234 = vrot.lane.b32.xlu0 %v987, 64
    %v1235 = vpop.permute.xlu0 %1234
    %1236 = vrot.lane.b32.xlu0 %v990, 64
    %v1237 = vpop.permute.xlu0 %1236
    %v1241 = vsel %vm393, %v1226, 0
    %v1244 = vsel %vm393, %v1227, 0
    %1246 = vmatpush.msra.mxu0 0.0
    %1247 = vmatpush.msra.mxu0 0.0
    %1248 = vmatpush.msra.mxu0 0.0
    %1249 = vmatpush.msra.mxu0 0.0
    %1250 = vmatpush.msra.mxu0 0.0
    %1251 = vmatpush.msra.mxu0 0.0
    %1252 = vmatpush.msra.mxu0 0.0
    %1253 = vmatpush.msra.mxu0 0.0
    %1254 = vmatpush.msra.mxu0 0.0
    %1255 = vmatpush.msra.mxu0 0.0
    %1256 = vmatpush.msra.mxu0 0.0
    %1257 = vmatpush.msra.mxu0 0.0
    %1258 = vmatpush.msra.mxu0 0.0
    %1259 = vmatpush.msra.mxu0 0.0
    %1260 = vmatpush.msra.mxu0 %v1237
    %1261 = vmatpush.msra.mxu0 %v1235
    %1262 = vmatmul.f32.gmra.mxu0 %v1241
    %v1263 = vpop.f32.mrf.mxu0
    %v1264 = vadd.f32 0.0, %v1263
    %1265 = vmatmul.f32.gmra.mxu0 %v1244
    %v1266 = vpop.f32.mrf.mxu0
    %v1267 = vadd.f32 0.0, %v1266
    %1268 = vdwg.mxu0
    %1269 = vrot.lane.b32.xlu0 %v995, 64
    %v1270 = vpop.permute.xlu0 %1269
    %1271 = vrot.lane.b32.xlu0 %v997, 64
    %v1272 = vpop.permute.xlu0 %1271
    %v1276 = vsel %vm393, %v1228, 0
    %v1279 = vsel %vm393, %v1229, 0
    %1281 = vmatpush.msra.mxu0 0.0
    %1282 = vmatpush.msra.mxu0 0.0
    %1283 = vmatpush.msra.mxu0 0.0
    %1284 = vmatpush.msra.mxu0 0.0
    %1285 = vmatpush.msra.mxu0 0.0
    %1286 = vmatpush.msra.mxu0 0.0
    %1287 = vmatpush.msra.mxu0 0.0
    %1288 = vmatpush.msra.mxu0 0.0
    %1289 = vmatpush.msra.mxu0 0.0
    %1290 = vmatpush.msra.mxu0 0.0
    %1291 = vmatpush.msra.mxu0 0.0
    %1292 = vmatpush.msra.mxu0 0.0
    %1293 = vmatpush.msra.mxu0 0.0
    %1294 = vmatpush.msra.mxu0 0.0
    %1295 = vmatpush.msra.mxu0 %v1272
    %1296 = vmatpush.msra.mxu0 %v1270
    %1297 = vmatmul.f32.gmra.mxu0 %v1276
    %v1298 = vpop.f32.mrf.mxu0
    %v1299 = vadd.f32 0.0, %v1298
    %1300 = vmatmul.f32.gmra.mxu0 %v1279
    %v1301 = vpop.f32.mrf.mxu0
    %v1302 = vadd.f32 0.0, %v1301
    %1303 = vdwg.mxu0
    %1304 = vrot.lane.b32.xlu0 %v999, 64
    %v1305 = vpop.permute.xlu0 %1304
    %1306 = vrot.lane.b32.xlu0 %v1001, 64
    %v1307 = vpop.permute.xlu0 %1306
    %v1311 = vsel %vm393, %v1230, 0
    %v1314 = vsel %vm393, %v1231, 0
    %1316 = vmatpush.msra.mxu0 0.0
    %1317 = vmatpush.msra.mxu0 0.0
    %1318 = vmatpush.msra.mxu0 0.0
    %1319 = vmatpush.msra.mxu0 0.0
    %1320 = vmatpush.msra.mxu0 0.0
    %1321 = vmatpush.msra.mxu0 0.0
    %1322 = vmatpush.msra.mxu0 0.0
    %1323 = vmatpush.msra.mxu0 0.0
    %1324 = vmatpush.msra.mxu0 0.0
    %1325 = vmatpush.msra.mxu0 0.0
    %1326 = vmatpush.msra.mxu0 0.0
    %1327 = vmatpush.msra.mxu0 0.0
    %1328 = vmatpush.msra.mxu0 0.0
    %1329 = vmatpush.msra.mxu0 0.0
    %1330 = vmatpush.msra.mxu0 %v1307
    %1331 = vmatpush.msra.mxu0 %v1305
    %1332 = vmatmul.f32.gmra.mxu0 %v1311
    %v1333 = vpop.f32.mrf.mxu0
    %v1334 = vadd.f32 0.0, %v1333
    %1335 = vmatmul.f32.gmra.mxu0 %v1314
    %v1336 = vpop.f32.mrf.mxu0
    %v1337 = vadd.f32 0.0, %v1336
    %1338 = vdwg.mxu0
    %1339 = vrot.lane.b32.xlu0 %v1003, 64
    %v1340 = vpop.permute.xlu0 %1339
    %1341 = vrot.lane.b32.xlu0 %v1005, 64
    %v1342 = vpop.permute.xlu0 %1341
    %v1346 = vsel %vm393, %v1232, 0
    %v1349 = vsel %vm393, %v1233, 0
    %1351 = vmatpush.msra.mxu0 0.0
    %1352 = vmatpush.msra.mxu0 0.0
    %1353 = vmatpush.msra.mxu0 0.0
    %1354 = vmatpush.msra.mxu0 0.0
    %1355 = vmatpush.msra.mxu0 0.0
    %1356 = vmatpush.msra.mxu0 0.0
    %1357 = vmatpush.msra.mxu0 0.0
    %1358 = vmatpush.msra.mxu0 0.0
    %1359 = vmatpush.msra.mxu0 0.0
    %1360 = vmatpush.msra.mxu0 0.0
    %1361 = vmatpush.msra.mxu0 0.0
    %1362 = vmatpush.msra.mxu0 0.0
    %1363 = vmatpush.msra.mxu0 0.0
    %1364 = vmatpush.msra.mxu0 0.0
    %1365 = vmatpush.msra.mxu0 %v1342
    %1366 = vmatpush.msra.mxu0 %v1340
    %1367 = vmatmul.f32.gmra.mxu0 %v1346
    %v1368 = vpop.f32.mrf.mxu0
    %v1369 = vadd.f32 0.0, %v1368
    %1370 = vmatmul.f32.gmra.mxu0 %v1349
    %v1371 = vpop.f32.mrf.mxu0
    %v1372 = vadd.f32 0.0, %v1371
    %1373 = vdwg.mxu0
    %1376 = vrot.lane.b32.xlu0 %v1299, 8
    %v1377 = vpop.permute.xlu0 %1376
    %1378 = vrot.lane.b32.xlu0 %v1302, 8
    %v1379 = vpop.permute.xlu0 %1378
    %1384 = vrot.lane.b32.xlu0 %v1334, 16
    %v1385 = vpop.permute.xlu0 %1384
    %1386 = vrot.lane.b32.xlu0 %v1337, 16
    %v1387 = vpop.permute.xlu0 %1386
    %1392 = vrot.lane.b32.xlu0 %v1369, 24
    %v1393 = vpop.permute.xlu0 %1392
    %1394 = vrot.lane.b32.xlu0 %v1372, 24
    %v1395 = vpop.permute.xlu0 %1394
    %v1398 = vsel %vm256, %v1264, %v1377
    %v1399 = vsel %vm256, %v1267, %v1379
    %v1400 = vsel %vm393, %v1398, %v1385
    %v1401 = vsel %vm393, %v1399, %v1387
    %v1402 = vsel %vm650, %v1400, %v1393
    %v1403 = vsel %vm650, %v1401, %v1395
    %s1404 = scalar_lea.vmem %s6, 32
    %v1405 = vld [vmem:[%s1404] sm:$0xff]
    %v1406 = vld [vmem:[%s1404 + $0x8] sm:$0xff]
    %v1407 = vld [vmem:[%s1404 + $0x10] sm:$0xff]
    %v1408 = vld [vmem:[%s1404 + $0x18] sm:$0xff]
    %v1410 = vsel %vm208, %v1402, 0
    %v1413 = vsel %vm208, %v1403, 0
    %1415 = vmatpush.msra.mxu0 0.0
    %1416 = vmatpush.msra.mxu0 0.0
    %1417 = vmatpush.msra.mxu0 0.0
    %1418 = vmatpush.msra.mxu0 0.0
    %1419 = vmatpush.msra.mxu0 0.0
    %1420 = vmatpush.msra.mxu0 0.0
    %1421 = vmatpush.msra.mxu0 0.0
    %1422 = vmatpush.msra.mxu0 0.0
    %1423 = vmatpush.msra.mxu0 0.0
    %1424 = vmatpush.msra.mxu0 0.0
    %1425 = vmatpush.msra.mxu0 0.0
    %1426 = vmatpush.msra.mxu0 0.0
    %1427 = vmatpush.msra.mxu0 %v1408
    %1428 = vmatpush.msra.mxu0 %v1407
    %1429 = vmatpush.msra.mxu0 %v1406
    %1430 = vmatpush.msra.mxu0 %v1405
    %1431 = vmatmul.f32.gmra.mxu0 %v1410
    %v1432 = vpop.f32.mrf.mxu0
    %v1433 = vadd.f32 0.0, %v1432
    %1434 = vmatmul.f32.gmra.mxu0 %v1413
    %v1435 = vpop.f32.mrf.mxu0
    %v1436 = vadd.f32 0.0, %v1435
    %1437 = vdwg.mxu0
    %s1438 = scalar_lea.vmem %s9, 8
    %v1439 = vld [vmem:[%s1438] sm:$0xff]
    %v1440 = vadd.f32 %v956, %v1433
    %v1441 = vadd.f32 %v957, %v1436
    %v1442 = vsel %vm208, %v1440, 0.0
    %1443 = vadd.xlane.f32.xlu0 %v1442
    %v1444 = vpop.xlane.xlu0 %1443
    %v1445 = vsel %vm208, %v1441, 0.0
    %1446 = vadd.xlane.f32.xlu0 %v1445
    %v1447 = vpop.xlane.xlu0 %1446
    %v1448 = vmul.f32 %v1444, %v701
    %v1449 = vmul.f32 %v1447, %v701
    %v1450 = vsub.f32 %v1440, %v1448
    %v1451 = vsub.f32 %v1441, %v1449
    %v1452 = vmul.f32 %v1450, %v1450
    %v1453 = vmul.f32 %v1451, %v1451
    %v1454 = vsel %vm208, %v1452, 0.0
    %1455 = vadd.xlane.f32.xlu0 %v1454
    %v1456 = vpop.xlane.xlu0 %1455
    %v1457 = vsel %vm208, %v1453, 0.0
    %1458 = vadd.xlane.f32.xlu0 %v1457
    %v1459 = vpop.xlane.xlu0 %1458
    %v1460 = vmul.f32 %v1456, %v701
    %v1461 = vmul.f32 %v1459, %v701
    %v1462 = vadd.f32 %v1460, 1e-05
    %v1463 = vadd.f32 %v1461, 1e-05
    %v1464 = vrsqrt.pop %v1462
    %v1465 = vmul.f32 %v1464, %v1462
    %v1466 = vmul.f32 %v1465, %v1464
    %v1467 = vmul.f32 0.5, %v1466
    %v1468 = vsub.f32 1.5, %v1467
    %v1469 = vmul.f32 %v1464, %v1468
    %vm1470 = vweird.f32 %v1462
    %vm1471 = vweird.f32 %v1464
    %vm1472 = vmor %vm1470, %vm1471
    %v1473 = vsel %vm1472, %v1464, %v1469
    %v1474 = vrsqrt.pop %v1463
    %v1475 = vmul.f32 %v1474, %v1463
    %v1476 = vmul.f32 %v1475, %v1474
    %v1477 = vmul.f32 0.5, %v1476
    %v1478 = vsub.f32 1.5, %v1477
    %v1479 = vmul.f32 %v1474, %v1478
    %vm1480 = vweird.f32 %v1463
    %vm1481 = vweird.f32 %v1474
    %vm1482 = vmor %vm1480, %vm1481
    %v1483 = vsel %vm1482, %v1474, %v1479
    %v1484 = vmul.f32 %v1450, %v1473
    %v1485 = vmul.f32 %v1451, %v1483
    %v1486 = vperm.slane %v1439, 2
    %v1487 = vmul.f32 %v1484, %v1486
    %v1488 = vmul.f32 %v1485, %v1486
    %v1489 = vperm.slane %v1439, 3
    %v1490 = vadd.f32 %v1487, %v1489
    %v1491 = vadd.f32 %v1488, %v1489
    %s1492 = scalar_lea.vmem %s7, 32
    %v1493 = vld [vmem:[%s1492] sm:$0xff]
    %v1494 = vld [vmem:[%s1492 + $0x8] sm:$0xff]
    %v1495 = vld [vmem:[%s1492 + $0x10] sm:$0xff]
    %v1496 = vld [vmem:[%s1492 + $0x18] sm:$0xff]
    %v1497 = vperm.slane %v1439, 0
    %v1499 = vsel %vm208, %v1490, 0
    %v1502 = vsel %vm208, %v1491, 0
    %1504 = vmatpush.msra.mxu0 0.0
    %1505 = vmatpush.msra.mxu0 0.0
    %1506 = vmatpush.msra.mxu0 0.0
    %1507 = vmatpush.msra.mxu0 0.0
    %1508 = vmatpush.msra.mxu0 0.0
    %1509 = vmatpush.msra.mxu0 0.0
    %1510 = vmatpush.msra.mxu0 0.0
    %1511 = vmatpush.msra.mxu0 0.0
    %1512 = vmatpush.msra.mxu0 0.0
    %1513 = vmatpush.msra.mxu0 0.0
    %1514 = vmatpush.msra.mxu0 0.0
    %1515 = vmatpush.msra.mxu0 0.0
    %1516 = vmatpush.msra.mxu0 %v1496
    %1517 = vmatpush.msra.mxu0 %v1495
    %1518 = vmatpush.msra.mxu0 %v1494
    %1519 = vmatpush.msra.mxu0 %v1493
    %1520 = vmatmul.f32.gmra.mxu0 %v1499
    %v1521 = vpop.f32.mrf.mxu0
    %v1522 = vadd.f32 %v1497, %v1521
    %1523 = vmatmul.f32.gmra.mxu0 %v1502
    %v1524 = vpop.f32.mrf.mxu0
    %v1525 = vadd.f32 %v1497, %v1524
    %1526 = vdwg.mxu0
    %v1527 = vmul.f32 %v1522, 0.5
    %v1528 = vmul.f32 %v1525, 0.5
    %v1529 = vmul.f32 %v1522, 0.70710677
    %v1530 = vmul.f32 %v1525, 0.70710677
    %v1531 = vmul.f32 %v1529, %v1529
    %v1532 = vmin.f32 16.0, %v1531
    %v1533 = vmul.f32 %v1532, 2.1237322e-06
    %v1534 = vadd.f32 %v1533, 0.00028619796
    %v1535 = vmul.f32 %v1532, %v1534
    %v1536 = vadd.f32 %v1535, 0.0036580483
    %v1537 = vmul.f32 %v1532, %v1536
    %v1538 = vadd.f32 %v1537, 0.05243302
    %v1539 = vmul.f32 %v1532, %v1538
    %v1540 = vadd.f32 %v1539, 0.18741608
    %v1541 = vmul.f32 %v1532, %v1540
    %v1542 = vadd.f32 %v1541, 1.1283791
    %v1543 = vmul.f32 %v1529, %v1542
    %v1544 = vmul.f32 %v1532, 3.8918573e-05
    %v1545 = vadd.f32 %v1544, 0.001143296
    %v1546 = vmul.f32 %v1532, %v1545
    %v1547 = vadd.f32 %v1546, 0.014752088
    %v1548 = vmul.f32 %v1532, %v1547
    %v1549 = vadd.f32 %v1548, 0.112945676
    %v1550 = vmul.f32 %v1532, %v1549
    %v1551 = vadd.f32 %v1550, 0.4994258
    %v1552 = vmul.f32 %v1532, %v1551
    %v1553 = vadd.f32 %v1552, 1.0
    %v1554 = vrcp.pop %v1553
    %v1555 = vmul.f32 %v1553, %v1554
    %v1556 = vsub.f32 1.0, %v1555
    %v1557 = vmul.f32 %v1554, %v1556
    %v1558 = vadd.f32 %v1554, %v1557
    %vm1559 = vweird.f32 %v1553
    %vm1560 = vweird.f32 %v1554
    %vm1561 = vmor %vm1559, %vm1560
    %v1562 = vsel %vm1561, %v1554, %v1558
    %v1563 = vand.u32 2147483647, %v1553
    %vm1564 = vcmp.eq.f32.partialorder %v1563, 8.507059e+37
    %v1565 = vand.u32 %v1553, 2147483648
    %v1566 = vor.u32 1.1754944e-38, %v1565
    %v1567 = vsel %vm1564, %v1566, %v1562
    %v1568 = vmul.f32 %v1543, %v1567
    %v1569 = vmin.f32 %v1568, 1.0
    %v1570 = vmax.f32 %v1569, -1.0
    %v1571 = vmul.f32 %v1530, %v1530
    %v1572 = vmin.f32 16.0, %v1571
    %v1573 = vmul.f32 %v1572, 2.1237322e-06
    %v1574 = vadd.f32 %v1573, 0.00028619796
    %v1575 = vmul.f32 %v1572, %v1574
    %v1576 = vadd.f32 %v1575, 0.0036580483
    %v1577 = vmul.f32 %v1572, %v1576
    %v1578 = vadd.f32 %v1577, 0.05243302
    %v1579 = vmul.f32 %v1572, %v1578
    %v1580 = vadd.f32 %v1579, 0.18741608
    %v1581 = vmul.f32 %v1572, %v1580
    %v1582 = vadd.f32 %v1581, 1.1283791
    %v1583 = vmul.f32 %v1530, %v1582
    %v1584 = vmul.f32 %v1572, 3.8918573e-05
    %v1585 = vadd.f32 %v1584, 0.001143296
    %v1586 = vmul.f32 %v1572, %v1585
    %v1587 = vadd.f32 %v1586, 0.014752088
    %v1588 = vmul.f32 %v1572, %v1587
    %v1589 = vadd.f32 %v1588, 0.112945676
    %v1590 = vmul.f32 %v1572, %v1589
    %v1591 = vadd.f32 %v1590, 0.4994258
    %v1592 = vmul.f32 %v1572, %v1591
    %v1593 = vadd.f32 %v1592, 1.0
    %v1594 = vrcp.pop %v1593
    %v1595 = vmul.f32 %v1593, %v1594
    %v1596 = vsub.f32 1.0, %v1595
    %v1597 = vmul.f32 %v1594, %v1596
    %v1598 = vadd.f32 %v1594, %v1597
    %vm1599 = vweird.f32 %v1593
    %vm1600 = vweird.f32 %v1594
    %vm1601 = vmor %vm1599, %vm1600
    %v1602 = vsel %vm1601, %v1594, %v1598
    %v1603 = vand.u32 2147483647, %v1593
    %vm1604 = vcmp.eq.f32.partialorder %v1603, 8.507059e+37
    %v1605 = vand.u32 %v1593, 2147483648
    %v1606 = vor.u32 1.1754944e-38, %v1605
    %v1607 = vsel %vm1604, %v1606, %v1602
    %v1608 = vmul.f32 %v1583, %v1607
    %v1609 = vmin.f32 %v1608, 1.0
    %v1610 = vmax.f32 %v1609, -1.0
    %v1611 = vadd.f32 %v1570, 1.0
    %v1612 = vadd.f32 %v1610, 1.0
    %v1613 = vmul.f32 %v1527, %v1611
    %v1614 = vmul.f32 %v1528, %v1612
    %s1615 = scalar_lea.vmem %s8, 64
    %v1616 = vld [vmem:[%s1615] sm:$0xff]
    %v1617 = vld [vmem:[%s1615 + $0x8] sm:$0xff]
    %v1618 = vld [vmem:[%s1615 + $0x10] sm:$0xff]
    %v1619 = vld [vmem:[%s1615 + $0x18] sm:$0xff]
    %v1620 = vld [vmem:[%s1615 + $0x20] sm:$0xff]
    %v1621 = vld [vmem:[%s1615 + $0x28] sm:$0xff]
    %v1622 = vld [vmem:[%s1615 + $0x30] sm:$0xff]
    %v1623 = vld [vmem:[%s1615 + $0x38] sm:$0xff]
    %v1624 = vperm.slane %v1439, 1
    %v1626 = vsel %vm166, %v1613, 0
    %v1629 = vsel %vm166, %v1614, 0
    %1631 = vmatpush.msra.mxu0 0.0
    %1632 = vmatpush.msra.mxu0 0.0
    %1633 = vmatpush.msra.mxu0 0.0
    %1634 = vmatpush.msra.mxu0 0.0
    %1635 = vmatpush.msra.mxu0 0.0
    %1636 = vmatpush.msra.mxu0 0.0
    %1637 = vmatpush.msra.mxu0 0.0
    %1638 = vmatpush.msra.mxu0 0.0
    %1639 = vmatpush.msra.mxu0 %v1623
    %1640 = vmatpush.msra.mxu0 %v1622
    %1641 = vmatpush.msra.mxu0 %v1621
    %1642 = vmatpush.msra.mxu0 %v1620
    %1643 = vmatpush.msra.mxu0 %v1619
    %1644 = vmatpush.msra.mxu0 %v1618
    %1645 = vmatpush.msra.mxu0 %v1617
    %1646 = vmatpush.msra.mxu0 %v1616
    %1647 = vmatmul.f32.gmra.mxu0 %v1626
    %v1648 = vpop.f32.mrf.mxu0
    %v1649 = vadd.f32 %v1624, %v1648
    %1650 = vmatmul.f32.gmra.mxu0 %v1629
    %v1651 = vpop.f32.mrf.mxu0
    %v1652 = vadd.f32 %v1624, %v1651
    %1653 = vdwg.mxu0
    %v1654 = vadd.f32 %v1490, %v1649
    %v1655 = vadd.f32 %v1491, %v1652
    %v1656 = vsel %vm208, %v1654, 0.0
    %1657 = vadd.xlane.f32.xlu0 %v1656
    %v1658 = vpop.xlane.xlu0 %1657
    %v1659 = vsel %vm208, %v1655, 0.0
    %1660 = vadd.xlane.f32.xlu0 %v1659
    %v1661 = vpop.xlane.xlu0 %1660
    %v1662 = vmul.f32 %v1658, %v701
    %v1663 = vmul.f32 %v1661, %v701
    %v1664 = vsub.f32 %v1654, %v1662
    %v1665 = vsub.f32 %v1655, %v1663
    %v1666 = vmul.f32 %v1664, %v1664
    %v1667 = vmul.f32 %v1665, %v1665
    %v1668 = vsel %vm208, %v1666, 0.0
    %1669 = vadd.xlane.f32.xlu0 %v1668
    %v1670 = vpop.xlane.xlu0 %1669
    %v1671 = vsel %vm208, %v1667, 0.0
    %1672 = vadd.xlane.f32.xlu0 %v1671
    %v1673 = vpop.xlane.xlu0 %1672
    %v1674 = vmul.f32 %v1670, %v701
    %v1675 = vmul.f32 %v1673, %v701
    %v1676 = vadd.f32 %v1674, 1e-05
    %v1677 = vadd.f32 %v1675, 1e-05
    %v1678 = vrsqrt.pop %v1676
    %v1679 = vmul.f32 %v1678, %v1676
    %v1680 = vmul.f32 %v1679, %v1678
    %v1681 = vmul.f32 0.5, %v1680
    %v1682 = vsub.f32 1.5, %v1681
    %v1683 = vmul.f32 %v1678, %v1682
    %vm1684 = vweird.f32 %v1676
    %vm1685 = vweird.f32 %v1678
    %vm1686 = vmor %vm1684, %vm1685
    %v1687 = vsel %vm1686, %v1678, %v1683
    %v1688 = vrsqrt.pop %v1677
    %v1689 = vmul.f32 %v1688, %v1677
    %v1690 = vmul.f32 %v1689, %v1688
    %v1691 = vmul.f32 0.5, %v1690
    %v1692 = vsub.f32 1.5, %v1691
    %v1693 = vmul.f32 %v1688, %v1692
    %vm1694 = vweird.f32 %v1677
    %vm1695 = vweird.f32 %v1688
    %vm1696 = vmor %vm1694, %vm1695
    %v1697 = vsel %vm1696, %v1688, %v1693
    %v1698 = vmul.f32 %v1664, %v1687
    %v1699 = vmul.f32 %v1665, %v1697
    %v1700 = vperm.slane %v1439, 4
    %v1701 = vmul.f32 %v1698, %v1700
    %v1702 = vmul.f32 %v1699, %v1700
    %v1703 = vperm.slane %v1439, 5
    %v1704 = vadd.f32 %v1701, %v1703
    %v1705 = vadd.f32 %v1702, %v1703
    %v1706 = vld [vmem:[%s10] sm:$0x3]
    %v1707 = vsel %vm208, %v1704, 0.0
    %1708 = vadd.xlane.f32.xlu0 %v1707
    %v1709 = vpop.xlane.xlu0 %1708
    %v1710 = vsel %vm208, %v1705, 0.0
    %1711 = vadd.xlane.f32.xlu0 %v1710
    %v1712 = vpop.xlane.xlu0 %1711
    %v1713 = vmul.f32 %v1709, %v701
    %v1714 = vmul.f32 %v1712, %v701
    %v1715 = vsub.f32 %v1704, %v1713
    %v1716 = vsub.f32 %v1705, %v1714
    %v1717 = vmul.f32 %v1715, %v1715
    %v1718 = vmul.f32 %v1716, %v1716
    %v1719 = vsel %vm208, %v1717, 0.0
    %1720 = vadd.xlane.f32.xlu0 %v1719
    %v1721 = vpop.xlane.xlu0 %1720
    %v1722 = vsel %vm208, %v1718, 0.0
    %1723 = vadd.xlane.f32.xlu0 %v1722
    %v1724 = vpop.xlane.xlu0 %1723
    %v1725 = vmul.f32 %v1721, %v701
    %v1726 = vmul.f32 %v1724, %v701
    %v1727 = vadd.f32 %v1725, 1e-05
    %v1728 = vadd.f32 %v1726, 1e-05
    %v1729 = vrsqrt.pop %v1727
    %v1730 = vmul.f32 %v1729, %v1727
    %v1731 = vmul.f32 %v1730, %v1729
    %v1732 = vmul.f32 0.5, %v1731
    %v1733 = vsub.f32 1.5, %v1732
    %v1734 = vmul.f32 %v1729, %v1733
    %vm1735 = vweird.f32 %v1727
    %vm1736 = vweird.f32 %v1729
    %vm1737 = vmor %vm1735, %vm1736
    %v1738 = vsel %vm1737, %v1729, %v1734
    %v1739 = vrsqrt.pop %v1728
    %v1740 = vmul.f32 %v1739, %v1728
    %v1741 = vmul.f32 %v1740, %v1739
    %v1742 = vmul.f32 0.5, %v1741
    %v1743 = vsub.f32 1.5, %v1742
    %v1744 = vmul.f32 %v1739, %v1743
    %vm1745 = vweird.f32 %v1728
    %vm1746 = vweird.f32 %v1739
    %vm1747 = vmor %vm1745, %vm1746
    %v1748 = vsel %vm1747, %v1739, %v1744
    %v1749 = vmul.f32 %v1715, %v1738
    %v1750 = vmul.f32 %v1716, %v1748
    %v1751 = vperm.slane %v1706, 0
    %v1752 = vmul.f32 %v1749, %v1751
    %v1753 = vmul.f32 %v1750, %v1751
    %v1754 = vperm.slane %v1706, 1
    %v1755 = vadd.f32 %v1752, %v1754
    %v1756 = vadd.f32 %v1753, %v1754
    %v1757 = vld [vmem:[%s4] sm:$0xff]
    %v1758 = vld [vmem:[%s4 + $0x8] sm:$0xff]
    %v1759 = vld [vmem:[%s4 + $0x10] sm:$0xff]
    %v1760 = vld [vmem:[%s4 + $0x18] sm:$0xff]
    %v1762 = vsel %vm208, %v1755, 0
    %v1765 = vsel %vm208, %v1756, 0
    %1767 = vmatpush.msra.mxu0 0.0
    %1768 = vmatpush.msra.mxu0 0.0
    %1769 = vmatpush.msra.mxu0 0.0
    %1770 = vmatpush.msra.mxu0 0.0
    %1771 = vmatpush.msra.mxu0 0.0
    %1772 = vmatpush.msra.mxu0 0.0
    %1773 = vmatpush.msra.mxu0 0.0
    %1774 = vmatpush.msra.mxu0 0.0
    %1775 = vmatpush.msra.mxu0 0.0
    %1776 = vmatpush.msra.mxu0 0.0
    %1777 = vmatpush.msra.mxu0 0.0
    %1778 = vmatpush.msra.mxu0 0.0
    %1779 = vmatpush.msra.mxu0 %v1760
    %1780 = vmatpush.msra.mxu0 %v1759
    %1781 = vmatpush.msra.mxu0 %v1758
    %1782 = vmatpush.msra.mxu0 %v1757
    %1783 = vmatmul.f32.gmra.mxu0 %v1762
    %v1784 = vpop.f32.mrf.mxu0
    %v1785 = vadd.f32 0.0, %v1784
    %1786 = vmatmul.f32.gmra.mxu0 %v1765
    %v1787 = vpop.f32.mrf.mxu0
    %v1788 = vadd.f32 0.0, %v1787
    %1789 = vdwg.mxu0
    %1790 = vst [vmem:[%s11] sm:$0xff] %v1785
    %1791 = vst [vmem:[%s11 + $0x8] sm:$0xff] %v1788
    // Predicated region
    $region50: #{gpt2_forward.1} parent=1 // pred_check
      _
    $region51: #{gpt2_forward.1} parent=1 // pred_check_branch
      %1793 = sbr.rel (0) target = $region53
    $region52: #{gpt2_forward.1} parent=1 // pred_region
      _
    $region53: #{gpt2_forward.1} parent=1 // pred_fallthru
      _
    // Predicated region
    $region54: #{gpt2_forward.1} parent=1 // pred_check
      _
    $region55: #{gpt2_forward.1} parent=1 // pred_check_branch
      %1795 = sbr.rel (0) target = $region57
    $region56: #{gpt2_forward.1} parent=1 // pred_region
      _
    $region57: #{gpt2_forward.1} parent=1 // pred_fallthru
      _
    %1796 = vsyncpa [#allocation3], 1

</llo_original>
